<compile_context>
chip_gen: v6e
topology: v6e:2x2x1
jax: 0.10.0
libtpu: 0.0.40
codegen_flags: <defaults>
</compile_context>

<pallas_src>
import functools

import jax
import jax.numpy as jnp
from jax import lax
from jax.experimental import pallas as pl
from jax.experimental.pallas import tpu as pltpu  # noqa: F401  (TPU backend)


def _sgru_seq_kernel(H, O,
                     # ---- inputs (whole arrays, VMEM-resident for the whole call) ----
                     xproj_ref,                   # (T, 3H) f32 : x_seq @ Wx0 + bx0
                     wh0_ref, bh0_ref,            # (H, 3H) bf16, (1, 3H) f32
                     wx1_ref, bx1_ref,            # (H, 3H) bf16, (1, 3H) f32
                     wh1_ref, bh1_ref,            # (H, 3H) bf16, (1, 3H) f32
                     wdec_ref, bdec_ref,          # (2O, H) f32 [h2o ; mod], (2O, 1) f32
                     tau_pre_ref, tau_post_ref,   # (1, H), (O, 1)
                     tau_U_ref, tau_STDP_ref, alpha_ref,       # (O, 1) each
                     h0_ref, v0_ref, h1_ref, v1_ref,           # (1, H) initial states
                     dU0_ref, trp0_ref, trq0_ref, trs0_ref,    # (O,H), (1,H), (O,1), (O,H)
                     # ---- outputs ----
                     o_ref,                        # (T, O, 1) per-step softmax (column layout)
                     nv0_ref, nh0_ref, nv1_ref, nh1_ref,       # (1, H) final states
                     ndU_ref, ntrp_ref, ntrq_ref, ntrs_ref):   # final plastic state
    sig = jax.nn.sigmoid
    f32 = jnp.float32
    bf16 = jnp.bfloat16
    T = o_ref.shape[0]

    # Loop-invariant parameter transforms, hoisted out of the timestep loop.
    sp = sig(tau_pre_ref[...])                                  # (1, H)
    sq = sig(tau_post_ref[...])                                 # (O, 1)
    salpha = sig(alpha_ref[...])                                # (O, 1)
    sU = jnp.broadcast_to(sig(tau_U_ref[...]), (O, H))          # (O, H) pre-broadcast
    sS = jnp.broadcast_to(sig(tau_STDP_ref[...]), (O, H))       # (O, H) pre-broadcast
    bh0 = bh0_ref[...]
    bx1 = bx1_ref[...]
    bh1 = bh1_ref[...]
    wdec = wdec_ref[...]                                        # (2O, H)
    bdec = bdec_ref[...]                                        # (2O, 1)

    def gru_tail(gx, gh, v):
        # gx = Wx*x + bx (3H cols), gh = Wh*h + bh (3H cols); columns [z | r | n].
        z = sig(gx[:, :H] + gh[:, :H])
        r = sig(gx[:, H:2 * H] + gh[:, H:2 * H])
        dv = gx[:, 2 * H:] + r * gh[:, 2 * H:]
        nv = (1.0 - z) * v + z * dv
        nh = jnp.where(nv >= 0, nv, 0.01 * nv)       # LeakyReLU(0.01)
        return nv, nh

    def step(t, carry):
        h0, v0, h1, v1, dU, trp, trq, trs = carry

        # ---- layer 0: x-projection precomputed for all T; per-step MXU is K=H only.
        gx0 = xproj_ref[pl.ds(t, 1), :]                                        # (1, 3H)
        gh0 = jnp.dot(h0.astype(bf16), wh0_ref[...],
                      preferred_element_type=f32) + bh0                        # (1, 3H)
        nv0, nh0 = gru_tail(gx0, gh0, v0)

        # ---- layer 1: two K=H matmuls (no [x | h] concat materialization).
        gx1 = jnp.dot(nh0.astype(bf16), wx1_ref[...],
                      preferred_element_type=f32) + bx1
        gh1 = jnp.dot(h1.astype(bf16), wh1_ref[...],
                      preferred_element_type=f32) + bh1
        nv1, nh1 = gru_tail(gx1, gh1, v1)

        # ---- plastic readout: all O=16 work stays on VPU/XLU/EUP in column layout.
        xh = nh1                                                               # (1, H)
        dec = jnp.sum(wdec * xh, axis=-1, keepdims=True) + bdec                # (2O, 1)
        h2o_c = dec[:O]                                                        # (O, 1)
        mod_c = dec[O:]                                                        # (O, 1)

        new_dU = (1.0 - sU) * dU + sU * jnp.tanh(mod_c) * trs                  # (O, H)
        xdU_c = jnp.sum(new_dU * xh, axis=-1, keepdims=True)                   # (O, 1)
        logits = h2o_c + salpha * xdU_c                                        # (O, 1)

        # Stable softmax over the O (sublane) axis.
        m = jnp.max(logits, axis=0, keepdims=True)
        e = jnp.exp(logits - m)
        o_c = e * pl.reciprocal(jnp.sum(e, axis=0, keepdims=True), approx=True)
        o_ref[t] = o_c                                # VMEM-resident; one HBM DMA at end

        ntrp = (1.0 - sp) * trp + sp * xh
        ntrq = (1.0 - sq) * trq + sq * o_c
        # STDP term: rank-1 outer products at B=1 -> broadcast multiplies (VPU),
        # using OLD trace_pre / trace_post, as in the module.
        stdp = o_c * trp - trq * xh                                            # (O, H)
        ntrs = (1.0 - sS) * trs + sS * stdp
        return (nh0, nv0, nh1, nv1, new_dU, ntrp, ntrq, ntrs)

    carry = (h0_ref[...], v0_ref[...], h1_ref[...], v1_ref[...],
             dU0_ref[...], trp0_ref[...], trq0_ref[...], trs0_ref[...])

    # Manual 2x unroll: exposes both iterations to the LLO scheduler so the next
    # step's layer-0 matmul overlaps the current step's decoder work.
    def step2(i, c):
        return step(2 * i + 1, step(2 * i, c))

    carry = lax.fori_loop(0, T // 2, step2, carry)
    if T % 2:
        carry = step(T - 1, carry)

    nh0_f, nv0_f, nh1_f, nv1_f, ndU_f, ntrp_f, ntrq_f, ntrs_f = carry
    nv0_ref[...] = nv0_f
    nh0_ref[...] = nh0_f
    nv1_ref[...] = nv1_f
    nh1_ref[...] = nh1_f
    ndU_ref[...] = ndU_f
    ntrp_ref[...] = ntrp_f
    ntrq_ref[...] = ntrq_f
    ntrs_ref[...] = ntrs_f


def make_sgru_sequence_fn(T, D, H, O):
    """T applications of SGRU.forward (num_layers=2, B=1) fused into one pallas_call."""
    f32 = jnp.float32
    bf16 = jnp.bfloat16

    out_shape = (
        jax.ShapeDtypeStruct((T, O, 1), f32),   # per-step softmax output (column layout)
        jax.ShapeDtypeStruct((1, H), f32),      # new_v layer 0
        jax.ShapeDtypeStruct((1, H), f32),      # new_h layer 0
        jax.ShapeDtypeStruct((1, H), f32),      # new_v layer 1
        jax.ShapeDtypeStruct((1, H), f32),      # new_h layer 1
        jax.ShapeDtypeStruct((O, H), f32),      # new_dU
        jax.ShapeDtypeStruct((1, H), f32),      # new_trace_pre
        jax.ShapeDtypeStruct((O, 1), f32),      # new_trace_post (column layout)
        jax.ShapeDtypeStruct((O, H), f32),      # new_trace_STDP
    )

    # No grid: the whole T-step recurrence runs in one kernel invocation with
    # loop-carried state; every operand/result is a whole-array VMEM block
    # (single DMA in, single DMA out).
    call = pl.pallas_call(
        functools.partial(_sgru_seq_kernel, H, O),
        out_shape=out_shape,
    )

    def fn(x_seq, h0, v0, h1, v1,
           wx0, bx0, wh0, bh0, wx1, bx1, wh1, bh1,
           w_h2o, b_h2o, tau_pre, tau_post, tau_U, tau_STDP, alpha,
           w_mod, b_mod, dU, tr_pre, tr_post, tr_stdp):
        # One-time layout plumbing / batched precompute (amortized over all T steps):
        #   * layer-0 input projection for every timestep as a single M=T matmul,
        #   * h2o / mod decoder weights packed into one (2O, H) tile,
        #   * MXU operands cast to bf16 (accumulation stays f32 in-kernel).
        xproj = x_seq.reshape(T, D) @ wx0 + bx0                       # (T, 3H) f32
        wdec = jnp.concatenate([w_h2o.T, w_mod], axis=0)              # (2O, H)
        bdec = jnp.concatenate([b_h2o.reshape(O, 1), b_mod.reshape(O, 1)], axis=0)
        (o_seq, nv0, nh0, nv1, nh1, ndU, ntrp, ntrq_c, ntrs) = call(
            xproj,
            wh0.astype(bf16), bh0,
            wx1.astype(bf16), bx1,
            wh1.astype(bf16), bh1,
            wdec, bdec,
            tau_pre, tau_post.reshape(O, 1), tau_U, tau_STDP, alpha.reshape(O, 1),
            h0, v0, h1, v1,
            dU, tr_pre, tr_post.reshape(O, 1), tr_stdp)
        return (nv0, nh0, nv1, nh1, ndU, ntrp, ntrq_c.reshape(1, O), ntrs,
                o_seq.reshape(T, O))

    return jax.jit(fn)


def sgru_reference_step(H, x, h0, v0, h1, v1,
                        wx0, bx0, wh0, bh0, wx1, bx1, wh1, bh1,
                        w_h2o, b_h2o, tau_pre, tau_post, tau_U, tau_STDP, alpha,
                        w_mod, b_mod, dU, tr_pre, tr_post, tr_stdp):
    sig = jax.nn.sigmoid

    def cell(xx, h, v, wx, bx, wh, bh):
        Wx = xx @ wx + bx
        Wh = h @ wh + bh
        z = sig(Wx[:, :H] + Wh[:, :H])
        r = sig(Wx[:, H:2 * H] + Wh[:, H:2 * H])
        dv = Wx[:, 2 * H:] + r * Wh[:, 2 * H:]
        nv = (1 - z) * v + z * dv
        return nv, jnp.where(nv >= 0, nv, 0.01 * nv)

    nv0, nh0 = cell(x, h0, v0, wx0, bx0, wh0, bh0)
    nv1, nh1 = cell(nh0, h1, v1, wx1, bx1, wh1, bh1)
    mod = nh1 @ w_mod.T + b_mod.T                                   # (1, O)
    sU = sig(tau_U)
    new_dU = (1 - sU) * dU + sU * jnp.tanh(mod.T) * tr_stdp
    logits = nh1 @ w_h2o + b_h2o + sig(alpha) * (nh1 @ new_dU.T)
    o = jax.nn.softmax(logits, axis=1)
    ntr_pre = (1 - sig(tau_pre)) * tr_pre + sig(tau_pre) * nh1
    ntr_post = (1 - sig(tau_post)) * tr_post + sig(tau_post) * o
    ntr_stdp = (1 - sig(tau_STDP)) * tr_stdp + sig(tau_STDP) * (o.T @ tr_pre - tr_post.T @ nh1)
    return nv0, nh0, nv1, nh1, new_dU, ntr_pre, ntr_post, ntr_stdp, o


if __name__ == "__main__":
    T, B, D, H, O = 8, 1, 64, 128, 16   # batch must be 1 (module broadcast semantics)
    f32 = jnp.float32
    key = jax.random.PRNGKey(0)
    ks = jax.random.split(key, 24)

    def xavier(k, shape):
        bound = (6.0 / (shape[0] + shape[1])) ** 0.5
        return jax.random.uniform(k, shape, f32, -bound, bound)

    def ortho_T(k, rows, cols):  # orthogonal (rows, cols) then transposed -> (cols, rows)
        a = jax.random.normal(k, (rows, cols), f32)
        q, _ = jnp.linalg.qr(a)
        return q.T

    def lin_uniform(k, shape, fan_in):
        bound = 1.0 / (fan_in ** 0.5)
        return jax.random.uniform(k, shape, f32, -bound, bound)

    bias3 = jnp.concatenate([jnp.ones((1, 2 * H), f32), jnp.zeros((1, H), f32)], axis=1)

    wx0 = xavier(ks[0], (D, 3 * H));  wh0 = ortho_T(ks[1], 3 * H, H)
    wx1 = xavier(ks[2], (H, 3 * H));  wh1 = ortho_T(ks[3], 3 * H, H)
    bx0 = bias3; bh0 = bias3; bx1 = bias3; bh1 = bias3

    w_h2o = lin_uniform(ks[4], (H, O), H)
    b_h2o = lin_uniform(ks[5], (1, O), H)
    tau_pre = jax.random.normal(ks[6], (1, H), f32) - 3.0
    tau_post = jax.random.normal(ks[7], (1, O), f32) - 3.0
    tau_U = jax.random.normal(ks[8], (O, 1), f32) - 3.0
    tau_STDP = jax.random.normal(ks[9], (O, 1), f32) - 3.0
    alpha = jax.random.normal(ks[10], (1, O), f32) - 3.0
    w_mod = lin_uniform(ks[11], (O, H), H)
    b_mod = lin_uniform(ks[12], (O, 1), H)

    x_seq = jax.random.normal(ks[13], (T, B, D), f32)
    h0 = jax.random.normal(ks[14], (B, H), f32) * 0.5
    v0 = jax.random.normal(ks[15], (B, H), f32) * 0.5
    h1 = jax.random.normal(ks[16], (B, H), f32) * 0.5
    v1 = jax.random.normal(ks[17], (B, H), f32) * 0.5
    dU = jax.random.normal(ks[18], (O, H), f32) * 0.1
    tr_pre = jax.random.normal(ks[19], (B, H), f32) * 0.1
    tr_post = jax.random.normal(ks[20], (B, O), f32) * 0.1
    tr_stdp = jax.random.normal(ks[21], (O, H), f32) * 0.1

    fn = make_sgru_sequence_fn(T, D, H, O)
    outs = jax.block_until_ready(fn(
        x_seq, h0, v0, h1, v1,
        wx0, bx0, wh0, bh0, wx1, bx1, wh1, bh1,
        w_h2o, b_h2o, tau_pre, tau_post, tau_U, tau_STDP, alpha,
        w_mod, b_mod, dU, tr_pre, tr_post, tr_stdp))

    # Pure-JAX f32 reference: apply the single-step module forward T times.
    step = jax.jit(functools.partial(sgru_reference_step, H))
    e_h0, e_v0, e_h1, e_v1 = h0, v0, h1, v1
    e_dU, e_trp, e_trq, e_trs = dU, tr_pre, tr_post, tr_stdp
    exp_o = []
    for t in range(T):
        (e_v0, e_h0, e_v1, e_h1, e_dU, e_trp, e_trq, e_trs, o_t) = step(
            x_seq[t], e_h0, e_v0, e_h1, e_v1,
            wx0, bx0, wh0, bh0, wx1, bx1, wh1, bh1,
            w_h2o, b_h2o, tau_pre, tau_post, tau_U, tau_STDP, alpha,
            w_mod, b_mod, e_dU, e_trp, e_trq, e_trs)
        exp_o.append(o_t[0])
    expected = (e_v0, e_h0, e_v1, e_h1, e_dU, e_trp, e_trq, e_trs,
                jnp.stack(exp_o, axis=0))

    # Tolerances account for bf16 MXU operands in the cell matmuls (rounding
    # compounds through the T-step recurrence); reference stays pure f32.
    names = ["new_v0", "new_h0", "new_v1", "new_h1", "new_dU",
             "new_trace_pre", "new_trace_post", "new_trace_STDP", "output_seq"]
    for name, got, exp in zip(names, outs, expected):
        assert got.shape == exp.shape, (name, got.shape, exp.shape)
        err = float(jnp.max(jnp.abs(got - exp)))
        assert jnp.allclose(got, exp, atol=1e-2, rtol=2e-2), (name, err)

    print("KERNEL_OK")
</pallas_src>

<mosaic_0001>
module attributes {stable_mosaic.version = 11 : i64} {
  func.func @_sgru_seq_kernel(%arg0: memref<8x384xf32, #tpu.memory_space<vmem>>, %arg1: memref<128x384xbf16, #tpu.memory_space<vmem>>, %arg2: memref<1x384xf32, #tpu.memory_space<vmem>>, %arg3: memref<128x384xbf16, #tpu.memory_space<vmem>>, %arg4: memref<1x384xf32, #tpu.memory_space<vmem>>, %arg5: memref<128x384xbf16, #tpu.memory_space<vmem>>, %arg6: memref<1x384xf32, #tpu.memory_space<vmem>>, %arg7: memref<32x128xf32, #tpu.memory_space<vmem>>, %arg8: memref<32x1xf32, #tpu.memory_space<vmem>>, %arg9: memref<1x128xf32, #tpu.memory_space<vmem>>, %arg10: memref<16x1xf32, #tpu.memory_space<vmem>>, %arg11: memref<16x1xf32, #tpu.memory_space<vmem>>, %arg12: memref<16x1xf32, #tpu.memory_space<vmem>>, %arg13: memref<16x1xf32, #tpu.memory_space<vmem>>, %arg14: memref<1x128xf32, #tpu.memory_space<vmem>>, %arg15: memref<1x128xf32, #tpu.memory_space<vmem>>, %arg16: memref<1x128xf32, #tpu.memory_space<vmem>>, %arg17: memref<1x128xf32, #tpu.memory_space<vmem>>, %arg18: memref<16x128xf32, #tpu.memory_space<vmem>>, %arg19: memref<1x128xf32, #tpu.memory_space<vmem>>, %arg20: memref<16x1xf32, #tpu.memory_space<vmem>>, %arg21: memref<16x128xf32, #tpu.memory_space<vmem>>, %arg22: memref<8x16x1xf32, #tpu.memory_space<vmem>>, %arg23: memref<1x128xf32, #tpu.memory_space<vmem>>, %arg24: memref<1x128xf32, #tpu.memory_space<vmem>>, %arg25: memref<1x128xf32, #tpu.memory_space<vmem>>, %arg26: memref<1x128xf32, #tpu.memory_space<vmem>>, %arg27: memref<16x128xf32, #tpu.memory_space<vmem>>, %arg28: memref<1x128xf32, #tpu.memory_space<vmem>>, %arg29: memref<16x1xf32, #tpu.memory_space<vmem>>, %arg30: memref<16x128xf32, #tpu.memory_space<vmem>>) attributes {dimension_semantics = [], scalar_prefetch = 0 : i64, scratch_operands = 0 : i64, tpu.core_type = #tpu.core_type<tc>} {
    %c0 = arith.constant 0 : index
    %c0_0 = arith.constant 0 : index
    %0 = vector.load %arg9[%c0, %c0_0] : memref<1x128xf32, #tpu.memory_space<vmem>>, vector<1x128xf32>
    %1 = arith.negf %0 : vector<1x128xf32>
    %2 = math.exp %1 : vector<1x128xf32>
    %cst = arith.constant 1.000000e+00 : f32
    %3 = vector.broadcast %cst : f32 to vector<1x128xf32>
    %4 = arith.addf %3, %2 : vector<1x128xf32>
    %5 = arith.divf %3, %4 : vector<1x128xf32>
    %c0_1 = arith.constant 0 : index
    %c0_2 = arith.constant 0 : index
    %6 = vector.load %arg10[%c0_1, %c0_2] : memref<16x1xf32, #tpu.memory_space<vmem>>, vector<16x1xf32>
    %7 = arith.negf %6 : vector<16x1xf32>
    %8 = math.exp %7 : vector<16x1xf32>
    %cst_3 = arith.constant 1.000000e+00 : f32
    %9 = vector.broadcast %cst_3 : f32 to vector<16x1xf32>
    %10 = arith.addf %9, %8 : vector<16x1xf32>
    %11 = arith.divf %9, %10 : vector<16x1xf32>
    %c0_4 = arith.constant 0 : index
    %c0_5 = arith.constant 0 : index
    %12 = vector.load %arg13[%c0_4, %c0_5] : memref<16x1xf32, #tpu.memory_space<vmem>>, vector<16x1xf32>
    %13 = arith.negf %12 : vector<16x1xf32>
    %14 = math.exp %13 : vector<16x1xf32>
    %cst_6 = arith.constant 1.000000e+00 : f32
    %15 = vector.broadcast %cst_6 : f32 to vector<16x1xf32>
    %16 = arith.addf %15, %14 : vector<16x1xf32>
    %17 = arith.divf %15, %16 : vector<16x1xf32>
    %c0_7 = arith.constant 0 : index
    %c0_8 = arith.constant 0 : index
    %18 = vector.load %arg11[%c0_7, %c0_8] : memref<16x1xf32, #tpu.memory_space<vmem>>, vector<16x1xf32>
    %19 = arith.negf %18 : vector<16x1xf32>
    %20 = math.exp %19 : vector<16x1xf32>
    %cst_9 = arith.constant 1.000000e+00 : f32
    %21 = vector.broadcast %cst_9 : f32 to vector<16x1xf32>
    %22 = arith.addf %21, %20 : vector<16x1xf32>
    %23 = arith.divf %21, %22 : vector<16x1xf32>
    %24 = vector.shape_cast %23 : vector<16x1xf32> to vector<16x1xf32>
    %25 = vector.broadcast %24 : vector<16x1xf32> to vector<16x128xf32>
    %c0_10 = arith.constant 0 : index
    %c0_11 = arith.constant 0 : index
    %26 = vector.load %arg12[%c0_10, %c0_11] : memref<16x1xf32, #tpu.memory_space<vmem>>, vector<16x1xf32>
    %27 = arith.negf %26 : vector<16x1xf32>
    %28 = math.exp %27 : vector<16x1xf32>
    %cst_12 = arith.constant 1.000000e+00 : f32
    %29 = vector.broadcast %cst_12 : f32 to vector<16x1xf32>
    %30 = arith.addf %29, %28 : vector<16x1xf32>
    %31 = arith.divf %29, %30 : vector<16x1xf32>
    %32 = vector.shape_cast %31 : vector<16x1xf32> to vector<16x1xf32>
    %33 = vector.broadcast %32 : vector<16x1xf32> to vector<16x128xf32>
    %c0_13 = arith.constant 0 : index
    %c0_14 = arith.constant 0 : index
    %34 = vector.load %arg2[%c0_13, %c0_14] : memref<1x384xf32, #tpu.memory_space<vmem>>, vector<1x384xf32>
    %c0_15 = arith.constant 0 : index
    %c0_16 = arith.constant 0 : index
    %35 = vector.load %arg4[%c0_15, %c0_16] : memref<1x384xf32, #tpu.memory_space<vmem>>, vector<1x384xf32>
    %c0_17 = arith.constant 0 : index
    %c0_18 = arith.constant 0 : index
    %36 = vector.load %arg6[%c0_17, %c0_18] : memref<1x384xf32, #tpu.memory_space<vmem>>, vector<1x384xf32>
    %c0_19 = arith.constant 0 : index
    %c0_20 = arith.constant 0 : index
    %37 = vector.load %arg7[%c0_19, %c0_20] : memref<32x128xf32, #tpu.memory_space<vmem>>, vector<32x128xf32>
    %c0_21 = arith.constant 0 : index
    %c0_22 = arith.constant 0 : index
    %38 = vector.load %arg8[%c0_21, %c0_22] : memref<32x1xf32, #tpu.memory_space<vmem>>, vector<32x1xf32>
    %c0_23 = arith.constant 0 : index
    %c0_24 = arith.constant 0 : index
    %39 = vector.load %arg14[%c0_23, %c0_24] : memref<1x128xf32, #tpu.memory_space<vmem>>, vector<1x128xf32>
    %c0_25 = arith.constant 0 : index
    %c0_26 = arith.constant 0 : index
    %40 = vector.load %arg15[%c0_25, %c0_26] : memref<1x128xf32, #tpu.memory_space<vmem>>, vector<1x128xf32>
    %c0_27 = arith.constant 0 : index
    %c0_28 = arith.constant 0 : index
    %41 = vector.load %arg16[%c0_27, %c0_28] : memref<1x128xf32, #tpu.memory_space<vmem>>, vector<1x128xf32>
    %c0_29 = arith.constant 0 : index
    %c0_30 = arith.constant 0 : index
    %42 = vector.load %arg17[%c0_29, %c0_30] : memref<1x128xf32, #tpu.memory_space<vmem>>, vector<1x128xf32>
    %c0_31 = arith.constant 0 : index
    %c0_32 = arith.constant 0 : index
    %43 = vector.load %arg18[%c0_31, %c0_32] : memref<16x128xf32, #tpu.memory_space<vmem>>, vector<16x128xf32>
    %c0_33 = arith.constant 0 : index
    %c0_34 = arith.constant 0 : index
    %44 = vector.load %arg19[%c0_33, %c0_34] : memref<1x128xf32, #tpu.memory_space<vmem>>, vector<1x128xf32>
    %c0_35 = arith.constant 0 : index
    %c0_36 = arith.constant 0 : index
    %45 = vector.load %arg20[%c0_35, %c0_36] : memref<16x1xf32, #tpu.memory_space<vmem>>, vector<16x1xf32>
    %c0_37 = arith.constant 0 : index
    %c0_38 = arith.constant 0 : index
    %46 = vector.load %arg21[%c0_37, %c0_38] : memref<16x128xf32, #tpu.memory_space<vmem>>, vector<16x128xf32>
    %c0_i32 = arith.constant 0 : i32
    %c4_i32 = arith.constant 4 : i32
    %47 = arith.addi %c0_i32, %c4_i32 : i32
    %c1_i32 = arith.constant 1 : i32
    %48:8 = scf.for %arg31 = %c0_i32 to %47 step %c1_i32 iter_args(%arg32 = %39, %arg33 = %40, %arg34 = %41, %arg35 = %42, %arg36 = %43, %arg37 = %44, %arg38 = %45, %arg39 = %46) -> (vector<1x128xf32>, vector<1x128xf32>, vector<1x128xf32>, vector<1x128xf32>, vector<16x128xf32>, vector<1x128xf32>, vector<16x1xf32>, vector<16x128xf32>)  : i32 {
      %c2_i32 = arith.constant 2 : i32
      %57 = arith.muli %c2_i32, %arg31 : i32
      %c1_i32_56 = arith.constant 1 : i32
      %58 = arith.addi %57, %c1_i32_56 : i32
      %c2_i32_57 = arith.constant 2 : i32
      %59 = arith.muli %c2_i32_57, %arg31 : i32
      %60 = arith.index_cast %59 : i32 to index
      %c0_58 = arith.constant 0 : index
      %61 = vector.load %arg0[%60, %c0_58] : memref<8x384xf32, #tpu.memory_space<vmem>>, vector<1x384xf32>
      %62 = arith.truncf %arg32 : vector<1x128xf32> to vector<1x128xbf16>
      %c0_59 = arith.constant 0 : index
      %c0_60 = arith.constant 0 : index
      %63 = vector.load %arg1[%c0_59, %c0_60] : memref<128x384xbf16, #tpu.memory_space<vmem>>, vector<128x384xbf16>
      %cst_61 = arith.constant dense<0.000000e+00> : vector<1x384xf32>
      %64 = tpu.matmul %62, %63, %cst_61 {dimension_numbers = #tpu.dot_dimension_numbers<[1], [0], [0], [1], [0, 0, 1, 1], [], []>} : vector<1x128xbf16>, vector<128x384xbf16>, vector<1x384xf32> -> vector<1x384xf32>
      %65 = arith.addf %64, %34 : vector<1x384xf32>
      %66 = vector.extract_strided_slice %61 {offsets = [0, 0], sizes = [1, 128], strides = [1, 1]} : vector<1x384xf32> to vector<1x128xf32>
      %67 = vector.extract_strided_slice %65 {offsets = [0, 0], sizes = [1, 128], strides = [1, 1]} : vector<1x384xf32> to vector<1x128xf32>
      %68 = arith.addf %66, %67 : vector<1x128xf32>
      %69 = arith.negf %68 : vector<1x128xf32>
      %70 = math.exp %69 : vector<1x128xf32>
      %cst_62 = arith.constant 1.000000e+00 : f32
      %71 = vector.broadcast %cst_62 : f32 to vector<1x128xf32>
      %72 = arith.addf %71, %70 : vector<1x128xf32>
      %73 = arith.divf %71, %72 : vector<1x128xf32>
      %74 = vector.extract_strided_slice %61 {offsets = [0, 128], sizes = [1, 128], strides = [1, 1]} : vector<1x384xf32> to vector<1x128xf32>
      %75 = vector.extract_strided_slice %65 {offsets = [0, 128], sizes = [1, 128], strides = [1, 1]} : vector<1x384xf32> to vector<1x128xf32>
      %76 = arith.addf %74, %75 : vector<1x128xf32>
      %77 = arith.negf %76 : vector<1x128xf32>
      %78 = math.exp %77 : vector<1x128xf32>
      %cst_63 = arith.constant 1.000000e+00 : f32
      %79 = vector.broadcast %cst_63 : f32 to vector<1x128xf32>
      %80 = arith.addf %79, %78 : vector<1x128xf32>
      %81 = arith.divf %79, %80 : vector<1x128xf32>
      %82 = vector.extract_strided_slice %61 {offsets = [0, 256], sizes = [1, 128], strides = [1, 1]} : vector<1x384xf32> to vector<1x128xf32>
      %83 = vector.extract_strided_slice %65 {offsets = [0, 256], sizes = [1, 128], strides = [1, 1]} : vector<1x384xf32> to vector<1x128xf32>
      %84 = arith.mulf %81, %83 : vector<1x128xf32>
      %85 = arith.addf %82, %84 : vector<1x128xf32>
      %cst_64 = arith.constant 1.000000e+00 : f32
      %86 = vector.broadcast %cst_64 : f32 to vector<1x128xf32>
      %87 = arith.subf %86, %73 : vector<1x128xf32>
      %88 = arith.mulf %87, %arg33 : vector<1x128xf32>
      %89 = arith.mulf %73, %85 : vector<1x128xf32>
      %90 = arith.addf %88, %89 : vector<1x128xf32>
      %cst_65 = arith.constant 0.000000e+00 : f32
      %91 = vector.broadcast %cst_65 : f32 to vector<1x128xf32>
      %92 = arith.cmpf oge, %90, %91 : vector<1x128xf32>
      %cst_66 = arith.constant 0.00999999977 : f32
      %93 = vector.broadcast %cst_66 : f32 to vector<1x128xf32>
      %94 = arith.mulf %93, %90 : vector<1x128xf32>
      %95 = arith.select %92, %90, %94 : vector<1x128xi1>, vector<1x128xf32>
      %96 = arith.truncf %95 : vector<1x128xf32> to vector<1x128xbf16>
      %c0_67 = arith.constant 0 : index
      %c0_68 = arith.constant 0 : index
      %97 = vector.load %arg3[%c0_67, %c0_68] : memref<128x384xbf16, #tpu.memory_space<vmem>>, vector<128x384xbf16>
      %cst_69 = arith.constant dense<0.000000e+00> : vector<1x384xf32>
      %98 = tpu.matmul %96, %97, %cst_69 {dimension_numbers = #tpu.dot_dimension_numbers<[1], [0], [0], [1], [0, 0, 1, 1], [], []>} : vector<1x128xbf16>, vector<128x384xbf16>, vector<1x384xf32> -> vector<1x384xf32>
      %99 = arith.addf %98, %35 : vector<1x384xf32>
      %100 = arith.truncf %arg34 : vector<1x128xf32> to vector<1x128xbf16>
      %c0_70 = arith.constant 0 : index
      %c0_71 = arith.constant 0 : index
      %101 = vector.load %arg5[%c0_70, %c0_71] : memref<128x384xbf16, #tpu.memory_space<vmem>>, vector<128x384xbf16>
      %cst_72 = arith.constant dense<0.000000e+00> : vector<1x384xf32>
      %102 = tpu.matmul %100, %101, %cst_72 {dimension_numbers = #tpu.dot_dimension_numbers<[1], [0], [0], [1], [0, 0, 1, 1], [], []>} : vector<1x128xbf16>, vector<128x384xbf16>, vector<1x384xf32> -> vector<1x384xf32>
      %103 = arith.addf %102, %36 : vector<1x384xf32>
      %104 = vector.extract_strided_slice %99 {offsets = [0, 0], sizes = [1, 128], strides = [1, 1]} : vector<1x384xf32> to vector<1x128xf32>
      %105 = vector.extract_strided_slice %103 {offsets = [0, 0], sizes = [1, 128], strides = [1, 1]} : vector<1x384xf32> to vector<1x128xf32>
      %106 = arith.addf %104, %105 : vector<1x128xf32>
      %107 = arith.negf %106 : vector<1x128xf32>
      %108 = math.exp %107 : vector<1x128xf32>
      %cst_73 = arith.constant 1.000000e+00 : f32
      %109 = vector.broadcast %cst_73 : f32 to vector<1x128xf32>
      %110 = arith.addf %109, %108 : vector<1x128xf32>
      %111 = arith.divf %109, %110 : vector<1x128xf32>
      %112 = vector.extract_strided_slice %99 {offsets = [0, 128], sizes = [1, 128], strides = [1, 1]} : vector<1x384xf32> to vector<1x128xf32>
      %113 = vector.extract_strided_slice %103 {offsets = [0, 128], sizes = [1, 128], strides = [1, 1]} : vector<1x384xf32> to vector<1x128xf32>
      %114 = arith.addf %112, %113 : vector<1x128xf32>
      %115 = arith.negf %114 : vector<1x128xf32>
      %116 = math.exp %115 : vector<1x128xf32>
      %cst_74 = arith.constant 1.000000e+00 : f32
      %117 = vector.broadcast %cst_74 : f32 to vector<1x128xf32>
      %118 = arith.addf %117, %116 : vector<1x128xf32>
      %119 = arith.divf %117, %118 : vector<1x128xf32>
      %120 = vector.extract_strided_slice %99 {offsets = [0, 256], sizes = [1, 128], strides = [1, 1]} : vector<1x384xf32> to vector<1x128xf32>
      %121 = vector.extract_strided_slice %103 {offsets = [0, 256], sizes = [1, 128], strides = [1, 1]} : vector<1x384xf32> to vector<1x128xf32>
      %122 = arith.mulf %119, %121 : vector<1x128xf32>
      %123 = arith.addf %120, %122 : vector<1x128xf32>
      %cst_75 = arith.constant 1.000000e+00 : f32
      %124 = vector.broadcast %cst_75 : f32 to vector<1x128xf32>
      %125 = arith.subf %124, %111 : vector<1x128xf32>
      %126 = arith.mulf %125, %arg35 : vector<1x128xf32>
      %127 = arith.mulf %111, %123 : vector<1x128xf32>
      %128 = arith.addf %126, %127 : vector<1x128xf32>
      %cst_76 = arith.constant 0.000000e+00 : f32
      %129 = vector.broadcast %cst_76 : f32 to vector<1x128xf32>
      %130 = arith.cmpf oge, %128, %129 : vector<1x128xf32>
      %cst_77 = arith.constant 0.00999999977 : f32
      %131 = vector.broadcast %cst_77 : f32 to vector<1x128xf32>
      %132 = arith.mulf %131, %128 : vector<1x128xf32>
      %133 = arith.select %130, %128, %132 : vector<1x128xi1>, vector<1x128xf32>
      %134 = vector.broadcast %133 : vector<1x128xf32> to vector<32x128xf32>
      %135 = arith.mulf %37, %134 : vector<32x128xf32>
      %cst_78 = arith.constant dense<0.000000e+00> : vector<32xf32>
      %136 = vector.multi_reduction <add>, %135, %cst_78 [1] : vector<32x128xf32> to vector<32xf32>
      %137 = vector.shape_cast %136 : vector<32xf32> to vector<32x1xf32>
      %138 = arith.addf %137, %38 : vector<32x1xf32>
      %139 = vector.extract_strided_slice %138 {offsets = [0, 0], sizes = [16, 1], strides = [1, 1]} : vector<32x1xf32> to vector<16x1xf32>
      %140 = vector.extract_strided_slice %138 {offsets = [16, 0], sizes = [16, 1], strides = [1, 1]} : vector<32x1xf32> to vector<16x1xf32>
      %cst_79 = arith.constant 1.000000e+00 : f32
      %141 = vector.broadcast %cst_79 : f32 to vector<16x128xf32>
      %142 = arith.subf %141, %25 : vector<16x128xf32>
      %143 = arith.mulf %142, %arg36 : vector<16x128xf32>
      %144 = math.tanh %140 : vector<16x1xf32>
      %145 = vector.broadcast %144 : vector<16x1xf32> to vector<16x128xf32>
      %146 = arith.mulf %25, %145 : vector<16x128xf32>
      %147 = arith.mulf %146, %arg39 : vector<16x128xf32>
      %148 = arith.addf %143, %147 : vector<16x128xf32>
      %149 = vector.broadcast %133 : vector<1x128xf32> to vector<16x128xf32>
      %150 = arith.mulf %148, %149 : vector<16x128xf32>
      %cst_80 = arith.constant dense<0.000000e+00> : vector<16xf32>
      %151 = vector.multi_reduction <add>, %150, %cst_80 [1] : vector<16x128xf32> to vector<16xf32>
      %152 = vector.shape_cast %151 : vector<16xf32> to vector<16x1xf32>
      %153 = arith.mulf %17, %152 : vector<16x1xf32>
      %154 = arith.addf %139, %153 : vector<16x1xf32>
      %cst_81 = arith.constant dense<0xFF800000> : vector<1xf32>
      %155 = vector.multi_reduction <maximumf>, %154, %cst_81 [0] : vector<16x1xf32> to vector<1xf32>
      %156 = vector.shape_cast %155 : vector<1xf32> to vector<1x1xf32>
      %157 = vector.broadcast %156 : vector<1x1xf32> to vector<16x1xf32>
      %158 = arith.subf %154, %157 : vector<16x1xf32>
      %159 = math.exp %158 : vector<16x1xf32>
      %cst_82 = arith.constant dense<0.000000e+00> : vector<1xf32>
      %160 = vector.multi_reduction <add>, %159, %cst_82 [0] : vector<16x1xf32> to vector<1xf32>
      %161 = vector.shape_cast %160 : vector<1xf32> to vector<1x1xf32>
      %162 = tpu.reciprocal %161 {approx = true} : vector<1x1xf32> -> vector<1x1xf32>
      %163 = vector.broadcast %162 : vector<1x1xf32> to vector<16x1xf32>
      %164 = arith.mulf %159, %163 : vector<16x1xf32>
      %165 = arith.index_cast %59 : i32 to index
      %c0_83 = arith.constant 0 : index
      %c0_84 = arith.constant 0 : index
      %166 = vector.load %arg22[%165, %c0_83, %c0_84] : memref<8x16x1xf32, #tpu.memory_space<vmem>>, vector<1x16x1xf32>
      %167 = vector.shape_cast %166 : vector<1x16x1xf32> to vector<16x1xf32>
      %168 = vector.shape_cast %164 : vector<16x1xf32> to vector<1x16x1xf32>
      tpu.vector_store %arg22[%165, %c0_83, %c0_84], %168 {strides = array<i32>} : memref<8x16x1xf32, #tpu.memory_space<vmem>>, vector<1x16x1xf32>,
      %cst_85 = arith.constant 1.000000e+00 : f32
      %169 = vector.broadcast %cst_85 : f32 to vector<1x128xf32>
      %170 = arith.subf %169, %5 : vector<1x128xf32>
      %171 = arith.mulf %170, %arg37 : vector<1x128xf32>
      %172 = arith.mulf %5, %133 : vector<1x128xf32>
      %173 = arith.addf %171, %172 : vector<1x128xf32>
      %cst_86 = arith.constant 1.000000e+00 : f32
      %174 = vector.broadcast %cst_86 : f32 to vector<16x1xf32>
      %175 = arith.subf %174, %11 : vector<16x1xf32>
      %176 = arith.mulf %175, %arg38 : vector<16x1xf32>
      %177 = arith.mulf %11, %164 : vector<16x1xf32>
      %178 = arith.addf %176, %177 : vector<16x1xf32>
      %179 = vector.broadcast %164 : vector<16x1xf32> to vector<16x128xf32>
      %180 = vector.broadcast %arg37 : vector<1x128xf32> to vector<16x128xf32>
      %181 = arith.mulf %179, %180 : vector<16x128xf32>
      %182 = vector.broadcast %arg38 : vector<16x1xf32> to vector<16x128xf32>
      %183 = vector.broadcast %133 : vector<1x128xf32> to vector<16x128xf32>
      %184 = arith.mulf %182, %183 : vector<16x128xf32>
      %185 = arith.subf %181, %184 : vector<16x128xf32>
      %cst_87 = arith.constant 1.000000e+00 : f32
      %186 = vector.broadcast %cst_87 : f32 to vector<16x128xf32>
      %187 = arith.subf %186, %33 : vector<16x128xf32>
      %188 = arith.mulf %187, %arg39 : vector<16x128xf32>
      %189 = arith.mulf %33, %185 : vector<16x128xf32>
      %190 = arith.addf %188, %189 : vector<16x128xf32>
      %191 = arith.index_cast %58 : i32 to index
      %c0_88 = arith.constant 0 : index
      %192 = vector.load %arg0[%191, %c0_88] : memref<8x384xf32, #tpu.memory_space<vmem>>, vector<1x384xf32>
      %193 = arith.truncf %95 : vector<1x128xf32> to vector<1x128xbf16>
      %c0_89 = arith.constant 0 : index
      %c0_90 = arith.constant 0 : index
      %194 = vector.load %arg1[%c0_89, %c0_90] : memref<128x384xbf16, #tpu.memory_space<vmem>>, vector<128x384xbf16>
      %cst_91 = arith.constant dense<0.000000e+00> : vector<1x384xf32>
      %195 = tpu.matmul %193, %194, %cst_91 {dimension_numbers = #tpu.dot_dimension_numbers<[1], [0], [0], [1], [0, 0, 1, 1], [], []>} : vector<1x128xbf16>, vector<128x384xbf16>, vector<1x384xf32> -> vector<1x384xf32>
      %196 = arith.addf %195, %34 : vector<1x384xf32>
      %197 = vector.extract_strided_slice %192 {offsets = [0, 0], sizes = [1, 128], strides = [1, 1]} : vector<1x384xf32> to vector<1x128xf32>
      %198 = vector.extract_strided_slice %196 {offsets = [0, 0], sizes = [1, 128], strides = [1, 1]} : vector<1x384xf32> to vector<1x128xf32>
      %199 = arith.addf %197, %198 : vector<1x128xf32>
      %200 = arith.negf %199 : vector<1x128xf32>
      %201 = math.exp %200 : vector<1x128xf32>
      %cst_92 = arith.constant 1.000000e+00 : f32
      %202 = vector.broadcast %cst_92 : f32 to vector<1x128xf32>
      %203 = arith.addf %202, %201 : vector<1x128xf32>
      %204 = arith.divf %202, %203 : vector<1x128xf32>
      %205 = vector.extract_strided_slice %192 {offsets = [0, 128], sizes = [1, 128], strides = [1, 1]} : vector<1x384xf32> to vector<1x128xf32>
      %206 = vector.extract_strided_slice %196 {offsets = [0, 128], sizes = [1, 128], strides = [1, 1]} : vector<1x384xf32> to vector<1x128xf32>
      %207 = arith.addf %205, %206 : vector<1x128xf32>
      %208 = arith.negf %207 : vector<1x128xf32>
      %209 = math.exp %208 : vector<1x128xf32>
      %cst_93 = arith.constant 1.000000e+00 : f32
      %210 = vector.broadcast %cst_93 : f32 to vector<1x128xf32>
      %211 = arith.addf %210, %209 : vector<1x128xf32>
      %212 = arith.divf %210, %211 : vector<1x128xf32>
      %213 = vector.extract_strided_slice %192 {offsets = [0, 256], sizes = [1, 128], strides = [1, 1]} : vector<1x384xf32> to vector<1x128xf32>
      %214 = vector.extract_strided_slice %196 {offsets = [0, 256], sizes = [1, 128], strides = [1, 1]} : vector<1x384xf32> to vector<1x128xf32>
      %215 = arith.mulf %212, %214 : vector<1x128xf32>
      %216 = arith.addf %213, %215 : vector<1x128xf32>
      %cst_94 = arith.constant 1.000000e+00 : f32
      %217 = vector.broadcast %cst_94 : f32 to vector<1x128xf32>
      %218 = arith.subf %217, %204 : vector<1x128xf32>
      %219 = arith.mulf %218, %90 : vector<1x128xf32>
      %220 = arith.mulf %204, %216 : vector<1x128xf32>
      %221 = arith.addf %219, %220 : vector<1x128xf32>
      %cst_95 = arith.constant 0.000000e+00 : f32
      %222 = vector.broadcast %cst_95 : f32 to vector<1x128xf32>
      %223 = arith.cmpf oge, %221, %222 : vector<1x128xf32>
      %cst_96 = arith.constant 0.00999999977 : f32
      %224 = vector.broadcast %cst_96 : f32 to vector<1x128xf32>
      %225 = arith.mulf %224, %221 : vector<1x128xf32>
      %226 = arith.select %223, %221, %225 : vector<1x128xi1>, vector<1x128xf32>
      %227 = arith.truncf %226 : vector<1x128xf32> to vector<1x128xbf16>
      %c0_97 = arith.constant 0 : index
      %c0_98 = arith.constant 0 : index
      %228 = vector.load %arg3[%c0_97, %c0_98] : memref<128x384xbf16, #tpu.memory_space<vmem>>, vector<128x384xbf16>
      %cst_99 = arith.constant dense<0.000000e+00> : vector<1x384xf32>
      %229 = tpu.matmul %227, %228, %cst_99 {dimension_numbers = #tpu.dot_dimension_numbers<[1], [0], [0], [1], [0, 0, 1, 1], [], []>} : vector<1x128xbf16>, vector<128x384xbf16>, vector<1x384xf32> -> vector<1x384xf32>
      %230 = arith.addf %229, %35 : vector<1x384xf32>
      %231 = arith.truncf %133 : vector<1x128xf32> to vector<1x128xbf16>
      %c0_100 = arith.constant 0 : index
      %c0_101 = arith.constant 0 : index
      %232 = vector.load %arg5[%c0_100, %c0_101] : memref<128x384xbf16, #tpu.memory_space<vmem>>, vector<128x384xbf16>
      %cst_102 = arith.constant dense<0.000000e+00> : vector<1x384xf32>
      %233 = tpu.matmul %231, %232, %cst_102 {dimension_numbers = #tpu.dot_dimension_numbers<[1], [0], [0], [1], [0, 0, 1, 1], [], []>} : vector<1x128xbf16>, vector<128x384xbf16>, vector<1x384xf32> -> vector<1x384xf32>
      %234 = arith.addf %233, %36 : vector<1x384xf32>
      %235 = vector.extract_strided_slice %230 {offsets = [0, 0], sizes = [1, 128], strides = [1, 1]} : vector<1x384xf32> to vector<1x128xf32>
      %236 = vector.extract_strided_slice %234 {offsets = [0, 0], sizes = [1, 128], strides = [1, 1]} : vector<1x384xf32> to vector<1x128xf32>
      %237 = arith.addf %235, %236 : vector<1x128xf32>
      %238 = arith.negf %237 : vector<1x128xf32>
      %239 = math.exp %238 : vector<1x128xf32>
      %cst_103 = arith.constant 1.000000e+00 : f32
      %240 = vector.broadcast %cst_103 : f32 to vector<1x128xf32>
      %241 = arith.addf %240, %239 : vector<1x128xf32>
      %242 = arith.divf %240, %241 : vector<1x128xf32>
      %243 = vector.extract_strided_slice %230 {offsets = [0, 128], sizes = [1, 128], strides = [1, 1]} : vector<1x384xf32> to vector<1x128xf32>
      %244 = vector.extract_strided_slice %234 {offsets = [0, 128], sizes = [1, 128], strides = [1, 1]} : vector<1x384xf32> to vector<1x128xf32>
      %245 = arith.addf %243, %244 : vector<1x128xf32>
      %246 = arith.negf %245 : vector<1x128xf32>
      %247 = math.exp %246 : vector<1x128xf32>
      %cst_104 = arith.constant 1.000000e+00 : f32
      %248 = vector.broadcast %cst_104 : f32 to vector<1x128xf32>
      %249 = arith.addf %248, %247 : vector<1x128xf32>
      %250 = arith.divf %248, %249 : vector<1x128xf32>
      %251 = vector.extract_strided_slice %230 {offsets = [0, 256], sizes = [1, 128], strides = [1, 1]} : vector<1x384xf32> to vector<1x128xf32>
      %252 = vector.extract_strided_slice %234 {offsets = [0, 256], sizes = [1, 128], strides = [1, 1]} : vector<1x384xf32> to vector<1x128xf32>
      %253 = arith.mulf %250, %252 : vector<1x128xf32>
      %254 = arith.addf %251, %253 : vector<1x128xf32>
      %cst_105 = arith.constant 1.000000e+00 : f32
      %255 = vector.broadcast %cst_105 : f32 to vector<1x128xf32>
      %256 = arith.subf %255, %242 : vector<1x128xf32>
      %257 = arith.mulf %256, %128 : vector<1x128xf32>
      %258 = arith.mulf %242, %254 : vector<1x128xf32>
      %259 = arith.addf %257, %258 : vector<1x128xf32>
      %cst_106 = arith.constant 0.000000e+00 : f32
      %260 = vector.broadcast %cst_106 : f32 to vector<1x128xf32>
      %261 = arith.cmpf oge, %259, %260 : vector<1x128xf32>
      %cst_107 = arith.constant 0.00999999977 : f32
      %262 = vector.broadcast %cst_107 : f32 to vector<1x128xf32>
      %263 = arith.mulf %262, %259 : vector<1x128xf32>
      %264 = arith.select %261, %259, %263 : vector<1x128xi1>, vector<1x128xf32>
      %265 = vector.broadcast %264 : vector<1x128xf32> to vector<32x128xf32>
      %266 = arith.mulf %37, %265 : vector<32x128xf32>
      %cst_108 = arith.constant dense<0.000000e+00> : vector<32xf32>
      %267 = vector.multi_reduction <add>, %266, %cst_108 [1] : vector<32x128xf32> to vector<32xf32>
      %268 = vector.shape_cast %267 : vector<32xf32> to vector<32x1xf32>
      %269 = arith.addf %268, %38 : vector<32x1xf32>
      %270 = vector.extract_strided_slice %269 {offsets = [0, 0], sizes = [16, 1], strides = [1, 1]} : vector<32x1xf32> to vector<16x1xf32>
      %271 = vector.extract_strided_slice %269 {offsets = [16, 0], sizes = [16, 1], strides = [1, 1]} : vector<32x1xf32> to vector<16x1xf32>
      %cst_109 = arith.constant 1.000000e+00 : f32
      %272 = vector.broadcast %cst_109 : f32 to vector<16x128xf32>
      %273 = arith.subf %272, %25 : vector<16x128xf32>
      %274 = arith.mulf %273, %148 : vector<16x128xf32>
      %275 = math.tanh %271 : vector<16x1xf32>
      %276 = vector.broadcast %275 : vector<16x1xf32> to vector<16x128xf32>
      %277 = arith.mulf %25, %276 : vector<16x128xf32>
      %278 = arith.mulf %277, %190 : vector<16x128xf32>
      %279 = arith.addf %274, %278 : vector<16x128xf32>
      %280 = vector.broadcast %264 : vector<1x128xf32> to vector<16x128xf32>
      %281 = arith.mulf %279, %280 : vector<16x128xf32>
      %cst_110 = arith.constant dense<0.000000e+00> : vector<16xf32>
      %282 = vector.multi_reduction <add>, %281, %cst_110 [1] : vector<16x128xf32> to vector<16xf32>
      %283 = vector.shape_cast %282 : vector<16xf32> to vector<16x1xf32>
      %284 = arith.mulf %17, %283 : vector<16x1xf32>
      %285 = arith.addf %270, %284 : vector<16x1xf32>
      %cst_111 = arith.constant dense<0xFF800000> : vector<1xf32>
      %286 = vector.multi_reduction <maximumf>, %285, %cst_111 [0] : vector<16x1xf32> to vector<1xf32>
      %287 = vector.shape_cast %286 : vector<1xf32> to vector<1x1xf32>
      %288 = vector.broadcast %287 : vector<1x1xf32> to vector<16x1xf32>
      %289 = arith.subf %285, %288 : vector<16x1xf32>
      %290 = math.exp %289 : vector<16x1xf32>
      %cst_112 = arith.constant dense<0.000000e+00> : vector<1xf32>
      %291 = vector.multi_reduction <add>, %290, %cst_112 [0] : vector<16x1xf32> to vector<1xf32>
      %292 = vector.shape_cast %291 : vector<1xf32> to vector<1x1xf32>
      %293 = tpu.reciprocal %292 {approx = true} : vector<1x1xf32> -> vector<1x1xf32>
      %294 = vector.broadcast %293 : vector<1x1xf32> to vector<16x1xf32>
      %295 = arith.mulf %290, %294 : vector<16x1xf32>
      %296 = arith.index_cast %58 : i32 to index
      %c0_113 = arith.constant 0 : index
      %c0_114 = arith.constant 0 : index
      %297 = vector.load %arg22[%296, %c0_113, %c0_114] : memref<8x16x1xf32, #tpu.memory_space<vmem>>, vector<1x16x1xf32>
      %298 = vector.shape_cast %297 : vector<1x16x1xf32> to vector<16x1xf32>
      %299 = vector.shape_cast %295 : vector<16x1xf32> to vector<1x16x1xf32>
      tpu.vector_store %arg22[%296, %c0_113, %c0_114], %299 {strides = array<i32>} : memref<8x16x1xf32, #tpu.memory_space<vmem>>, vector<1x16x1xf32>,
      %cst_115 = arith.constant 1.000000e+00 : f32
      %300 = vector.broadcast %cst_115 : f32 to vector<1x128xf32>
      %301 = arith.subf %300, %5 : vector<1x128xf32>
      %302 = arith.mulf %301, %173 : vector<1x128xf32>
      %303 = arith.mulf %5, %264 : vector<1x128xf32>
      %304 = arith.addf %302, %303 : vector<1x128xf32>
      %cst_116 = arith.constant 1.000000e+00 : f32
      %305 = vector.broadcast %cst_116 : f32 to vector<16x1xf32>
      %306 = arith.subf %305, %11 : vector<16x1xf32>
      %307 = arith.mulf %306, %178 : vector<16x1xf32>
      %308 = arith.mulf %11, %295 : vector<16x1xf32>
      %309 = arith.addf %307, %308 : vector<16x1xf32>
      %310 = vector.broadcast %295 : vector<16x1xf32> to vector<16x128xf32>
      %311 = vector.broadcast %173 : vector<1x128xf32> to vector<16x128xf32>
      %312 = arith.mulf %310, %311 : vector<16x128xf32>
      %313 = vector.broadcast %178 : vector<16x1xf32> to vector<16x128xf32>
      %314 = vector.broadcast %264 : vector<1x128xf32> to vector<16x128xf32>
      %315 = arith.mulf %313, %314 : vector<16x128xf32>
      %316 = arith.subf %312, %315 : vector<16x128xf32>
      %cst_117 = arith.constant 1.000000e+00 : f32
      %317 = vector.broadcast %cst_117 : f32 to vector<16x128xf32>
      %318 = arith.subf %317, %33 : vector<16x128xf32>
      %319 = arith.mulf %318, %190 : vector<16x128xf32>
      %320 = arith.mulf %33, %316 : vector<16x128xf32>
      %321 = arith.addf %319, %320 : vector<16x128xf32>
      scf.yield %226, %221, %264, %259, %279, %304, %309, %321 : vector<1x128xf32>, vector<1x128xf32>, vector<1x128xf32>, vector<1x128xf32>, vector<16x128xf32>, vector<1x128xf32>, vector<16x1xf32>, vector<16x128xf32>
    }
    %c4_i32_39 = arith.constant 4 : i32
    %c0_40 = arith.constant 0 : index
    %c0_41 = arith.constant 0 : index
    %49 = vector.load %arg23[%c0_40, %c0_41] : memref<1x128xf32, #tpu.memory_space<vmem>>, vector<1x128xf32>
    tpu.vector_store %arg23[%c0_40, %c0_41], %48#1 {strides = array<i32>} : memref<1x128xf32, #tpu.memory_space<vmem>>, vector<1x128xf32>,
    %c0_42 = arith.constant 0 : index
    %c0_43 = arith.constant 0 : index
    %50 = vector.load %arg24[%c0_42, %c0_43] : memref<1x128xf32, #tpu.memory_space<vmem>>, vector<1x128xf32>
    tpu.vector_store %arg24[%c0_42, %c0_43], %48#0 {strides = array<i32>} : memref<1x128xf32, #tpu.memory_space<vmem>>, vector<1x128xf32>,
    %c0_44 = arith.constant 0 : index
    %c0_45 = arith.constant 0 : index
    %51 = vector.load %arg25[%c0_44, %c0_45] : memref<1x128xf32, #tpu.memory_space<vmem>>, vector<1x128xf32>
    tpu.vector_store %arg25[%c0_44, %c0_45], %48#3 {strides = array<i32>} : memref<1x128xf32, #tpu.memory_space<vmem>>, vector<1x128xf32>,
    %c0_46 = arith.constant 0 : index
    %c0_47 = arith.constant 0 : index
    %52 = vector.load %arg26[%c0_46, %c0_47] : memref<1x128xf32, #tpu.memory_space<vmem>>, vector<1x128xf32>
    tpu.vector_store %arg26[%c0_46, %c0_47], %48#2 {strides = array<i32>} : memref<1x128xf32, #tpu.memory_space<vmem>>, vector<1x128xf32>,
    %c0_48 = arith.constant 0 : index
    %c0_49 = arith.constant 0 : index
    %53 = vector.load %arg27[%c0_48, %c0_49] : memref<16x128xf32, #tpu.memory_space<vmem>>, vector<16x128xf32>
    tpu.vector_store %arg27[%c0_48, %c0_49], %48#4 {strides = array<i32>} : memref<16x128xf32, #tpu.memory_space<vmem>>, vector<16x128xf32>,
    %c0_50 = arith.constant 0 : index
    %c0_51 = arith.constant 0 : index
    %54 = vector.load %arg28[%c0_50, %c0_51] : memref<1x128xf32, #tpu.memory_space<vmem>>, vector<1x128xf32>
    tpu.vector_store %arg28[%c0_50, %c0_51], %48#5 {strides = array<i32>} : memref<1x128xf32, #tpu.memory_space<vmem>>, vector<1x128xf32>,
    %c0_52 = arith.constant 0 : index
    %c0_53 = arith.constant 0 : index
    %55 = vector.load %arg29[%c0_52, %c0_53] : memref<16x1xf32, #tpu.memory_space<vmem>>, vector<16x1xf32>
    tpu.vector_store %arg29[%c0_52, %c0_53], %48#6 {strides = array<i32>} : memref<16x1xf32, #tpu.memory_space<vmem>>, vector<16x1xf32>,
    %c0_54 = arith.constant 0 : index
    %c0_55 = arith.constant 0 : index
    %56 = vector.load %arg30[%c0_54, %c0_55] : memref<16x128xf32, #tpu.memory_space<vmem>>, vector<16x128xf32>
    tpu.vector_store %arg30[%c0_54, %c0_55], %48#7 {strides = array<i32>} : memref<16x128xf32, #tpu.memory_space<vmem>>, vector<16x128xf32>,
    return
  }
}

</mosaic_0001>

<llo_original>
// kernel: fn.1
$region0: #{fn.1}
  #allocation0 [shape = 'u32[]', space=smem, size = 0x4, offset = 0x4, fixed_abs, tag = 'smem constant byte address 0x4 - core index']
  #allocation1 [shape = 'u32[144,128]{1,0:T(1,128)}', space=vmem, size = 0x12000, scoped, tag = 'internal scratch']
  %s0 = inlined_call_operand.smem [shape: u32[31], index: -1, kind: input, shape index: {}]
  %s1 = sld [smem:[%s0]]
  %s2 = scalar_lea.smem %s0, 1
  %s3 = sld [smem:[%s2]]
  %s4 = scalar_lea.smem %s0, 2
  %s5 = sld [smem:[%s4]]
  %s6 = scalar_lea.smem %s0, 3
  %s7 = sld [smem:[%s6]]
  %s8 = scalar_lea.smem %s0, 4
  %s9 = sld [smem:[%s8]]
  %s10 = scalar_lea.smem %s0, 5
  %s11 = sld [smem:[%s10]]
  %s12 = scalar_lea.smem %s0, 6
  %s13 = sld [smem:[%s12]]
  %s14 = scalar_lea.smem %s0, 7
  %s15 = sld [smem:[%s14]]
  %s16 = scalar_lea.smem %s0, 8
  %s17 = sld [smem:[%s16]]
  %s18 = scalar_lea.smem %s0, 9
  %s19 = sld [smem:[%s18]]
  %s20 = scalar_lea.smem %s0, 10
  %s21 = sld [smem:[%s20]]
  %s22 = scalar_lea.smem %s0, 11
  %s23 = sld [smem:[%s22]]
  %s24 = scalar_lea.smem %s0, 12
  %s25 = sld [smem:[%s24]]
  %s26 = scalar_lea.smem %s0, 13
  %s27 = sld [smem:[%s26]]
  %s28 = scalar_lea.smem %s0, 14
  %s29 = sld [smem:[%s28]]
  %s30 = scalar_lea.smem %s0, 15
  %s31 = sld [smem:[%s30]]
  %s32 = scalar_lea.smem %s0, 16
  %s33 = sld [smem:[%s32]]
  %s34 = scalar_lea.smem %s0, 17
  %s35 = sld [smem:[%s34]]
  %s36 = scalar_lea.smem %s0, 18
  %s37 = sld [smem:[%s36]]
  %s38 = scalar_lea.smem %s0, 19
  %s39 = sld [smem:[%s38]]
  %s40 = scalar_lea.smem %s0, 20
  %s41 = sld [smem:[%s40]]
  %s42 = scalar_lea.smem %s0, 21
  %s43 = sld [smem:[%s42]]
  %s44 = scalar_lea.smem %s0, 22
  %s45 = sld [smem:[%s44]]
  %s46 = scalar_lea.smem %s0, 23
  %s47 = sld [smem:[%s46]]
  %s48 = scalar_lea.smem %s0, 24
  %s49 = sld [smem:[%s48]]
  %s50 = scalar_lea.smem %s0, 25
  %s51 = sld [smem:[%s50]]
  %s52 = scalar_lea.smem %s0, 26
  %s53 = sld [smem:[%s52]]
  %s54 = scalar_lea.smem %s0, 27
  %s55 = sld [smem:[%s54]]
  %s56 = scalar_lea.smem %s0, 28
  %s57 = sld [smem:[%s56]]
  %s58 = scalar_lea.smem %s0, 29
  %s59 = sld [smem:[%s58]]
  %s60 = scalar_lea.smem %s0, 30
  %s61 = sld [smem:[%s60]]
  %62 = xla_tuple %s45, %s47, %s49, %s51, %s53, %s55, %s57, %s59, %s61
  %s63 = sld [smem:[#allocation0]]
  $region169: #{fn.1} parent=0
    _
  %s65 = ssub.s32 1, %s63
  %s66 = scalar_select 0, %s65, %s63
  $region1: #{fn.1} parent=0
    #allocation2 [shape = 'u8[512]{0}', space=vmem, size = 0x400, scoped, tag = 'output window, operand 1, single buffered']
    #allocation3 [shape = 's32[1]{0}', space=sflag, size = 0x4, scoped, tag = 'scoped memory for fn.1']
    #allocation4 [shape = 'u8[512]{0}', space=vmem, size = 0x400, scoped, tag = 'output window, operand 2, single buffered']
    #allocation5 [shape = 's32[1]{0}', space=sflag, size = 0x4, scoped, tag = 'scoped memory for fn.1']
    #allocation6 [shape = 'u8[512]{0}', space=vmem, size = 0x400, scoped, tag = 'output window, operand 3, single buffered']
    #allocation7 [shape = 'u8[512]{0}', space=vmem, size = 0x400, scoped, tag = 'output window, operand 4, single buffered']
    #allocation8 [shape = 's32[1]{0}', space=sflag, size = 0x4, scoped, tag = 'scoped memory for fn.1']
    #allocation9 [shape = 'u8[8192]{0}', space=vmem, size = 0x2000, scoped, tag = 'output window, operand 5, single buffered']
    #allocation10 [shape = 'u8[512]{0}', space=vmem, size = 0x400, scoped, tag = 'output window, operand 6, single buffered']
    #allocation11 [shape = 's32[1]{0}', space=sflag, size = 0x4, scoped, tag = 'scoped memory for fn.1']
    #allocation12 [shape = 'u8[8192]{0}', space=vmem, size = 0x2000, scoped, tag = 'output window, operand 8, single buffered']
    %67 = vsyncpa [#allocation3], 0
    %68 = vsyncpa [#allocation5], 0
    %69 = vsyncpa [#allocation8], 0
    %70 = vsyncpa [#allocation11], 0
    // Predicated region
    $region2: #{fn.1} parent=1 // pred_check
      _
    $region3: #{fn.1} parent=1 // pred_check_branch
      %72 = sbr.rel (0) target = $region5
    $region4: #{fn.1} parent=1 // pred_region
      _
    $region5: #{fn.1} parent=1 // pred_fallthru
      _
    // Predicated region
    $region6: #{fn.1} parent=1 // pred_check
      _
    $region7: #{fn.1} parent=1 // pred_check_branch
      %74 = sbr.rel (0) target = $region9
    $region8: #{fn.1} parent=1 // pred_region
      _
    $region9: #{fn.1} parent=1 // pred_fallthru
      _
    // Predicated region
    $region10: #{fn.1} parent=1 // pred_check
      _
    $region11: #{fn.1} parent=1 // pred_check_branch
      %76 = sbr.rel (0) target = $region13
    $region12: #{fn.1} parent=1 // pred_region
      _
    $region13: #{fn.1} parent=1 // pred_fallthru
      _
    // Predicated region
    $region14: #{fn.1} parent=1 // pred_check
      _
    $region15: #{fn.1} parent=1 // pred_check_branch
      %78 = sbr.rel (0) target = $region17
    $region16: #{fn.1} parent=1 // pred_region
      _
    $region17: #{fn.1} parent=1 // pred_fallthru
      _
    // Predicated region
    $region18: #{fn.1} parent=1 // pred_check
      _
    $region19: #{fn.1} parent=1 // pred_check_branch
      %80 = sbr.rel (0) target = $region21
    $region20: #{fn.1} parent=1 // pred_region
      _
    $region21: #{fn.1} parent=1 // pred_fallthru
      _
    // Predicated region
    $region22: #{fn.1} parent=1 // pred_check
      _
    $region23: #{fn.1} parent=1 // pred_check_branch
      %82 = sbr.rel (0) target = $region25
    $region24: #{fn.1} parent=1 // pred_region
      _
    $region25: #{fn.1} parent=1 // pred_fallthru
      _
    // Predicated region
    $region26: #{fn.1} parent=1 // pred_check
      _
    $region27: #{fn.1} parent=1 // pred_check_branch
      %84 = sbr.rel (0) target = $region29
    $region28: #{fn.1} parent=1 // pred_region
      _
    $region29: #{fn.1} parent=1 // pred_fallthru
      _
    // Predicated region
    $region30: #{fn.1} parent=1 // pred_check
      _
    $region31: #{fn.1} parent=1 // pred_check_branch
      %86 = sbr.rel (0) target = $region33
    $region32: #{fn.1} parent=1 // pred_region
      _
    $region33: #{fn.1} parent=1 // pred_fallthru
      _
    // Predicated region
    $region34: #{fn.1} parent=1 // pred_check
      _
    $region35: #{fn.1} parent=1 // pred_check_branch
      %88 = sbr.rel (0) target = $region37
    $region36: #{fn.1} parent=1 // pred_region
      _
    $region37: #{fn.1} parent=1 // pred_fallthru
      _
    // Predicated region
    $region38: #{fn.1} parent=1 // pred_check
      _
    $region39: #{fn.1} parent=1 // pred_check_branch
      %90 = sbr.rel (0) target = $region41
    $region40: #{fn.1} parent=1 // pred_region
      _
    $region41: #{fn.1} parent=1 // pred_fallthru
      _
    // Predicated region
    $region42: #{fn.1} parent=1 // pred_check
      _
    $region43: #{fn.1} parent=1 // pred_check_branch
      %92 = sbr.rel (0) target = $region45
    $region44: #{fn.1} parent=1 // pred_region
      _
    $region45: #{fn.1} parent=1 // pred_fallthru
      _
    // Predicated region
    $region46: #{fn.1} parent=1 // pred_check
      _
    $region47: #{fn.1} parent=1 // pred_check_branch
      %94 = sbr.rel (0) target = $region49
    $region48: #{fn.1} parent=1 // pred_region
      _
    $region49: #{fn.1} parent=1 // pred_fallthru
      _
    // Predicated region
    $region50: #{fn.1} parent=1 // pred_check
      _
    $region51: #{fn.1} parent=1 // pred_check_branch
      %96 = sbr.rel (0) target = $region53
    $region52: #{fn.1} parent=1 // pred_region
      _
    $region53: #{fn.1} parent=1 // pred_fallthru
      _
    // Predicated region
    $region54: #{fn.1} parent=1 // pred_check
      _
    $region55: #{fn.1} parent=1 // pred_check_branch
      %98 = sbr.rel (0) target = $region57
    $region56: #{fn.1} parent=1 // pred_region
      _
    $region57: #{fn.1} parent=1 // pred_fallthru
      _
    // Predicated region
    $region58: #{fn.1} parent=1 // pred_check
      _
    $region59: #{fn.1} parent=1 // pred_check_branch
      %100 = sbr.rel (0) target = $region61
    $region60: #{fn.1} parent=1 // pred_region
      _
    $region61: #{fn.1} parent=1 // pred_fallthru
      _
    // Predicated region
    $region62: #{fn.1} parent=1 // pred_check
      _
    $region63: #{fn.1} parent=1 // pred_check_branch
      %102 = sbr.rel (0) target = $region65
    $region64: #{fn.1} parent=1 // pred_region
      _
    $region65: #{fn.1} parent=1 // pred_fallthru
      _
    // Predicated region
    $region66: #{fn.1} parent=1 // pred_check
      _
    $region67: #{fn.1} parent=1 // pred_check_branch
      %104 = sbr.rel (0) target = $region69
    $region68: #{fn.1} parent=1 // pred_region
      _
    $region69: #{fn.1} parent=1 // pred_fallthru
      _
    // Predicated region
    $region70: #{fn.1} parent=1 // pred_check
      _
    $region71: #{fn.1} parent=1 // pred_check_branch
      %106 = sbr.rel (0) target = $region73
    $region72: #{fn.1} parent=1 // pred_region
      _
    $region73: #{fn.1} parent=1 // pred_fallthru
      _
    // Predicated region
    $region74: #{fn.1} parent=1 // pred_check
      _
    $region75: #{fn.1} parent=1 // pred_check_branch
      %108 = sbr.rel (0) target = $region77
    $region76: #{fn.1} parent=1 // pred_region
      _
    $region77: #{fn.1} parent=1 // pred_fallthru
      _
    // Predicated region
    $region78: #{fn.1} parent=1 // pred_check
      _
    $region79: #{fn.1} parent=1 // pred_check_branch
      %110 = sbr.rel (0) target = $region81
    $region80: #{fn.1} parent=1 // pred_region
      _
    $region81: #{fn.1} parent=1 // pred_fallthru
      _
    // Predicated region
    $region82: #{fn.1} parent=1 // pred_check
      _
    $region83: #{fn.1} parent=1 // pred_check_branch
      %112 = sbr.rel (0) target = $region85
    $region84: #{fn.1} parent=1 // pred_region
      _
    $region85: #{fn.1} parent=1 // pred_fallthru
      _
    // Predicated region
    $region86: #{fn.1} parent=1 // pred_check
      _
    $region87: #{fn.1} parent=1 // pred_check_branch
      %114 = sbr.rel (0) target = $region89
    $region88: #{fn.1} parent=1 // pred_region
      _
    $region89: #{fn.1} parent=1 // pred_fallthru
      _
    %v116 = vld [vmem:[%s19] sm:$0x1]
    %v117 = vxor.u32 %v116, 2147483648
    %v118 = vmul.f32 %v117, 1.442695
    %v119 = vpow.pop %v118
    %v120 = vadd.f32 %v119, 1.0
    %v121 = vrcp.pop %v120
    %v122 = vmul.f32 1.0, %v121
    %v123 = vld [vmem:[%s21] sm:$0xff]
    %v124 = vld [vmem:[%s21 + $0x8] sm:$0xff]
    %v125 = vxor.u32 %v123, 2147483648
    %v126 = vxor.u32 %v124, 2147483648
    %v127 = vmul.f32 %v125, 1.442695
    %v128 = vpow.pop %v127
    %v129 = vmul.f32 %v126, 1.442695
    %v130 = vpow.pop %v129
    %v131 = vadd.f32 %v128, 1.0
    %v132 = vadd.f32 %v130, 1.0
    %v133 = vrcp.pop %v131
    %v134 = vmul.f32 1.0, %v133
    %v135 = vrcp.pop %v132
    %v136 = vmul.f32 1.0, %v135
    %v137 = vld [vmem:[%s27] sm:$0xff]
    %v138 = vld [vmem:[%s27 + $0x8] sm:$0xff]
    %v139 = vxor.u32 %v137, 2147483648
    %v140 = vxor.u32 %v138, 2147483648
    %v141 = vmul.f32 %v139, 1.442695
    %v142 = vpow.pop %v141
    %v143 = vmul.f32 %v140, 1.442695
    %v144 = vpow.pop %v143
    %v145 = vadd.f32 %v142, 1.0
    %v146 = vadd.f32 %v144, 1.0
    %v147 = vrcp.pop %v145
    %v148 = vmul.f32 1.0, %v147
    %v149 = vrcp.pop %v146
    %v150 = vmul.f32 1.0, %v149
    %v151 = vld [vmem:[%s23] sm:$0xff]
    %v152 = vld [vmem:[%s23 + $0x8] sm:$0xff]
    %v153 = vxor.u32 %v151, 2147483648
    %v154 = vxor.u32 %v152, 2147483648
    %v155 = vmul.f32 %v153, 1.442695
    %v156 = vpow.pop %v155
    %v157 = vmul.f32 %v154, 1.442695
    %v158 = vpow.pop %v157
    %v159 = vadd.f32 %v156, 1.0
    %v160 = vadd.f32 %v158, 1.0
    %v161 = vrcp.pop %v159
    %v162 = vmul.f32 1.0, %v161
    %v163 = vrcp.pop %v160
    %v164 = vmul.f32 1.0, %v163
    %166 = vset.pattern.permute.xlu0 0
    %167 = vperm.xlu0 %166, %v162
    %v168 = vpop.permute.xlu0 %167
    %171 = vset.pattern.permute.xlu0 0
    %172 = vperm.xlu0 %171, %v164
    %v173 = vpop.permute.xlu0 %172
    %v175 = vld [vmem:[%s25] sm:$0xff]
    %v176 = vld [vmem:[%s25 + $0x8] sm:$0xff]
    %v177 = vxor.u32 %v175, 2147483648
    %v178 = vxor.u32 %v176, 2147483648
    %v179 = vmul.f32 %v177, 1.442695
    %v180 = vpow.pop %v179
    %v181 = vmul.f32 %v178, 1.442695
    %v182 = vpow.pop %v181
    %v183 = vadd.f32 %v180, 1.0
    %v184 = vadd.f32 %v182, 1.0
    %v185 = vrcp.pop %v183
    %v186 = vmul.f32 1.0, %v185
    %v187 = vrcp.pop %v184
    %v188 = vmul.f32 1.0, %v187
    %190 = vset.pattern.permute.xlu0 0
    %191 = vperm.xlu0 %190, %v186
    %v192 = vpop.permute.xlu0 %191
    %195 = vset.pattern.permute.xlu0 0
    %196 = vperm.xlu0 %195, %v188
    %v197 = vpop.permute.xlu0 %196
    %v199 = vld [vmem:[%s5] sm:$0x7]
    %v200 = vld [vmem:[%s9] sm:$0x7]
    %v201 = vld [vmem:[%s13] sm:$0x7]
    %v202 = vld [vmem:[%s15] sm:$0xff]
    %v203 = vld [vmem:[%s15 + $0x8] sm:$0xff]
    %v204 = vld [vmem:[%s15 + $0x10] sm:$0xff]
    %v205 = vld [vmem:[%s15 + $0x18] sm:$0xff]
    %v206 = vld [vmem:[%s17] sm:$0xff]
    %v207 = vld [vmem:[%s17 + $0x8] sm:$0xff]
    %v208 = vld [vmem:[%s17 + $0x10] sm:$0xff]
    %v209 = vld [vmem:[%s17 + $0x18] sm:$0xff]
    %v210 = vld [vmem:[%s29] sm:$0x1]
    %v211 = vld [vmem:[%s31] sm:$0x1]
    %v212 = vld [vmem:[%s33] sm:$0x1]
    %v213 = vld [vmem:[%s35] sm:$0x1]
    %v214 = vld [vmem:[%s37] sm:$0xff]
    %v215 = vld [vmem:[%s37 + $0x8] sm:$0xff]
    %v216 = vld [vmem:[%s39] sm:$0x1]
    %v217 = vld [vmem:[%s41] sm:$0xff]
    %v218 = vld [vmem:[%s41 + $0x8] sm:$0xff]
    %v219 = vld [vmem:[%s43] sm:$0xff]
    %v220 = vld [vmem:[%s43 + $0x8] sm:$0xff]
    loop: start=0, step=1, limit=4
    $region90: #{fn.1} parent=1 // loop_pre_header
      _
    $region91: #{fn.1} parent=1 // loop_header
      %s222 = sphi 0, %s226
      %p223 = scmp.ge.s32.totalorder %s222, 4
      %v227 = vphi %v210, %v1487
      %v228 = vphi %v211, %v1484
      %v229 = vphi %v212, %v1994
      %v230 = vphi %v213, %v1991
      %v231 = vphi %v214, %v2033
      %v232 = vphi %v215, %v2034
      %v233 = vphi %v216, %v2078
      %v234 = vphi %v217, %v2083
      %v235 = vphi %v218, %v2084
      %v236 = vphi %v219, %v2121
      %v237 = vphi %v220, %v2122
    $region92: #{fn.1} parent=1 // loop_header_branch
      %225 = sbr.rel (%p223) target = $region96
    $region93: #{fn.1} parent=1 // loop_body
      %s238 = smul.u32 %s222, 2
      %s239 = sadd.s32 %s238, 1
      %s240 = sshra.s32 %s238, 3
      %s241 = sand.u32 %s238, 7
      %s242 = sshra.s32 %s238, 3
      %s243 = sand.u32 %s238, 7
      %s244 = smul.u32 %s240, 3
      %s245 = smul.u32 %s244, 8
      %s246 = sadd.s32 %s245, %s243
      %s247 = scalar_lea.vmem %s1, %s246
      %v248 = vld [vmem:[%s247] ss:$8 sm:$0x7]
      %v249 = vpack.c.bf16 %v227, %v227
      %v250 = vld [vmem:[%s3] sm:$0xff]
      %v251 = vld [vmem:[%s3 + $0x8] sm:$0xf]
      %v252 = vld [vmem:[%s3 + $0xc] sm:$0xff]
      %v253 = vld [vmem:[%s3 + $0x14] sm:$0xf]
      %v254 = vld [vmem:[%s3 + $0x18] sm:$0xff]
      %v255 = vld [vmem:[%s3 + $0x20] sm:$0xf]
      %v256 = vld [vmem:[%s3 + $0x24] sm:$0xff]
      %v257 = vld [vmem:[%s3 + $0x2c] sm:$0xf]
      %v258 = vld [vmem:[%s3 + $0x30] sm:$0xff]
      %v259 = vld [vmem:[%s3 + $0x38] sm:$0xf]
      %v260 = vld [vmem:[%s3 + $0x3c] sm:$0xff]
      %v261 = vld [vmem:[%s3 + $0x44] sm:$0xf]
      %v262 = vld [vmem:[%s3 + $0x48] sm:$0xff]
      %v263 = vld [vmem:[%s3 + $0x50] sm:$0xf]
      %v264 = vld [vmem:[%s3 + $0x54] sm:$0xff]
      %v265 = vld [vmem:[%s3 + $0x5c] sm:$0xf]
      %v266 = vld [vmem:[%s3 + $0x60] sm:$0xff]
      %v267 = vld [vmem:[%s3 + $0x68] sm:$0xf]
      %v268 = vld [vmem:[%s3 + $0x6c] sm:$0xff]
      %v269 = vld [vmem:[%s3 + $0x74] sm:$0xf]
      %v270 = vld [vmem:[%s3 + $0x78] sm:$0xff]
      %v271 = vld [vmem:[%s3 + $0x80] sm:$0xf]
      %v272 = vld [vmem:[%s3 + $0x84] sm:$0xff]
      %v273 = vld [vmem:[%s3 + $0x8c] sm:$0xf]
      %v274 = vld [vmem:[%s3 + $0x90] sm:$0xff]
      %v275 = vld [vmem:[%s3 + $0x98] sm:$0xf]
      %v276 = vld [vmem:[%s3 + $0x9c] sm:$0xff]
      %v277 = vld [vmem:[%s3 + $0xa4] sm:$0xf]
      %v278 = vld [vmem:[%s3 + $0xa8] sm:$0xff]
      %v279 = vld [vmem:[%s3 + $0xb0] sm:$0xf]
      %v280 = vld [vmem:[%s3 + $0xb4] sm:$0xff]
      %v281 = vld [vmem:[%s3 + $0xbc] sm:$0xf]
      %v314 = vunpack.c.l.b16 %v250
      %v315 = vunpack.c.h.b16 %v250
      %v316 = vunpack.c.l.b16 %v251
      %v317 = vunpack.c.l.b16 %v252
      %v318 = vunpack.c.h.b16 %v252
      %v319 = vunpack.c.l.b16 %v253
      %v320 = vunpack.c.l.b16 %v254
      %v321 = vunpack.c.h.b16 %v254
      %v322 = vunpack.c.l.b16 %v255
      %v323 = vunpack.c.l.b16 %v256
      %v324 = vunpack.c.h.b16 %v256
      %v325 = vunpack.c.l.b16 %v257
      %v326 = vunpack.c.l.b16 %v258
      %v327 = vunpack.c.h.b16 %v258
      %v328 = vunpack.c.l.b16 %v259
      %v329 = vunpack.c.l.b16 %v260
      %v330 = vunpack.c.h.b16 %v260
      %v331 = vunpack.c.l.b16 %v261
      %v332 = vunpack.c.l.b16 %v262
      %v333 = vunpack.c.h.b16 %v262
      %v334 = vunpack.c.l.b16 %v263
      %v335 = vunpack.c.l.b16 %v264
      %v336 = vunpack.c.h.b16 %v264
      %v337 = vunpack.c.l.b16 %v265
      %v338 = vunpack.c.l.b16 %v266
      %v339 = vunpack.c.h.b16 %v266
      %v340 = vunpack.c.l.b16 %v267
      %v341 = vunpack.c.l.b16 %v268
      %v342 = vunpack.c.h.b16 %v268
      %v343 = vunpack.c.l.b16 %v269
      %v344 = vunpack.c.l.b16 %v270
      %v345 = vunpack.c.h.b16 %v270
      %v346 = vunpack.c.l.b16 %v271
      %v347 = vunpack.c.l.b16 %v272
      %v348 = vunpack.c.h.b16 %v272
      %v349 = vunpack.c.l.b16 %v273
      %v350 = vunpack.c.l.b16 %v274
      %v351 = vunpack.c.h.b16 %v274
      %v352 = vunpack.c.l.b16 %v275
      %v353 = vunpack.c.l.b16 %v276
      %v354 = vunpack.c.h.b16 %v276
      %v355 = vunpack.c.l.b16 %v277
      %v356 = vunpack.c.l.b16 %v278
      %v357 = vunpack.c.h.b16 %v278
      %v358 = vunpack.c.l.b16 %v279
      %v359 = vunpack.c.l.b16 %v280
      %v360 = vunpack.c.h.b16 %v280
      %v361 = vunpack.c.l.b16 %v281
      %v362 = vpack.c.b16 %v317, %v314
      %v363 = vpack.c.b16 %v318, %v315
      %v364 = vpack.c.b16 %v319, %v316
      %v365 = vpack.c.b16 %v323, %v320
      %v366 = vpack.c.b16 %v324, %v321
      %v367 = vpack.c.b16 %v325, %v322
      %v368 = vpack.c.b16 %v329, %v326
      %v369 = vpack.c.b16 %v330, %v327
      %v370 = vpack.c.b16 %v331, %v328
      %v371 = vpack.c.b16 %v335, %v332
      %v372 = vpack.c.b16 %v336, %v333
      %v373 = vpack.c.b16 %v337, %v334
      %v374 = vpack.c.b16 %v341, %v338
      %v375 = vpack.c.b16 %v342, %v339
      %v376 = vpack.c.b16 %v343, %v340
      %v377 = vpack.c.b16 %v347, %v344
      %v378 = vpack.c.b16 %v348, %v345
      %v379 = vpack.c.b16 %v349, %v346
      %v380 = vpack.c.b16 %v353, %v350
      %v381 = vpack.c.b16 %v354, %v351
      %v382 = vpack.c.b16 %v355, %v352
      %v383 = vpack.c.b16 %v359, %v356
      %v384 = vpack.c.b16 %v360, %v357
      %v385 = vpack.c.b16 %v361, %v358
      %v411 = vlaneseq
      %v412 = vshrl.u32 %v411, 7
      %v413 = vsub.s32 0, %v412
      %v414 = vrot.slane %v199, %v413
      %v415 = vlaneseq
      %v416 = vshrl.u32 %v415, 7
      %v417 = vsub.s32 1, %v416
      %v418 = vrot.slane %v199, %v417
      %v419 = vlaneseq
      %v420 = vshrl.u32 %v419, 7
      %v421 = vsub.s32 2, %v420
      %v422 = vrot.slane %v199, %v421
      %426 = vmatprep.subr.bf16.mxu0 %v384
      %427 = vmatpush1.bf16.msra.mxu0 %v383
      %428 = vmatprep.subr.bf16.mxu0 %v381
      %429 = vmatpush1.bf16.msra.mxu0 %v380
      %430 = vmatprep.subr.bf16.mxu0 %v378
      %431 = vmatpush1.bf16.msra.mxu0 %v377
      %432 = vmatprep.subr.bf16.mxu0 %v375
      %433 = vmatpush1.bf16.msra.mxu0 %v374
      %434 = vmatprep.subr.bf16.mxu0 %v372
      %435 = vmatpush1.bf16.msra.mxu0 %v371
      %436 = vmatprep.subr.bf16.mxu0 %v369
      %437 = vmatpush1.bf16.msra.mxu0 %v368
      %438 = vmatprep.subr.bf16.mxu0 %v366
      %439 = vmatpush1.bf16.msra.mxu0 %v365
      %440 = vmatprep.subr.bf16.mxu0 %v363
      %441 = vmatpush1.bf16.msra.mxu0 %v362
      %442 = vmatprep.subr.bf16.mxu0 0
      %443 = vmatpush2.bf16.msra.mxu0 0
      %444 = vmatprep.subr.bf16.mxu0 0
      %445 = vmatpush2.bf16.msra.mxu0 0
      %446 = vmatprep.subr.bf16.mxu0 0
      %447 = vmatpush2.bf16.msra.mxu0 0
      %448 = vmatprep.subr.bf16.mxu0 0
      %449 = vmatpush2.bf16.msra.mxu0 0
      %450 = vmatprep.subr.bf16.mxu0 0
      %451 = vmatpush2.bf16.msra.mxu0 0
      %452 = vmatprep.subr.bf16.mxu0 0
      %453 = vmatpush2.bf16.msra.mxu0 0
      %454 = vmatprep.subr.bf16.mxu0 0
      %455 = vmatpush2.bf16.msra.mxu0 0
      %456 = vmatprep.subr.bf16.mxu0 0
      %457 = vmatpush2.bf16.msra.mxu0 0
      %458 = vmatprep.mubr.bf16.mxu0 0
      %459 = vmatmul.mubr.bf16.gmra.mxu0 %v249
      %v460 = vpop.f32.mrf.mxu0
      %v461 = vadd.f32 %v414, %v460
      %v462 = vpop.f32.mrf.mxu0
      %v463 = vadd.f32 %v418, %v462
      %v464 = vpop.f32.mrf.mxu0
      %v465 = vpop.f32.mrf.mxu0
      %466 = vdwg.mxu0
      %467 = vmatprep.subr.bf16.mxu0 0
      %468 = vmatpush1.bf16.msra.mxu0 %v385
      %469 = vmatprep.subr.bf16.mxu0 0
      %470 = vmatpush1.bf16.msra.mxu0 %v382
      %471 = vmatprep.subr.bf16.mxu0 0
      %472 = vmatpush1.bf16.msra.mxu0 %v379
      %473 = vmatprep.subr.bf16.mxu0 0
      %474 = vmatpush1.bf16.msra.mxu0 %v376
      %475 = vmatprep.subr.bf16.mxu0 0
      %476 = vmatpush1.bf16.msra.mxu0 %v373
      %477 = vmatprep.subr.bf16.mxu0 0
      %478 = vmatpush1.bf16.msra.mxu0 %v370
      %479 = vmatprep.subr.bf16.mxu0 0
      %480 = vmatpush1.bf16.msra.mxu0 %v367
      %481 = vmatprep.subr.bf16.mxu0 0
      %482 = vmatpush1.bf16.msra.mxu0 %v364
      %483 = vmatprep.subr.bf16.mxu0 0
      %484 = vmatpush2.bf16.msra.mxu0 0
      %485 = vmatprep.subr.bf16.mxu0 0
      %486 = vmatpush2.bf16.msra.mxu0 0
      %487 = vmatprep.subr.bf16.mxu0 0
      %488 = vmatpush2.bf16.msra.mxu0 0
      %489 = vmatprep.subr.bf16.mxu0 0
      %490 = vmatpush2.bf16.msra.mxu0 0
      %491 = vmatprep.subr.bf16.mxu0 0
      %492 = vmatpush2.bf16.msra.mxu0 0
      %493 = vmatprep.subr.bf16.mxu0 0
      %494 = vmatpush2.bf16.msra.mxu0 0
      %495 = vmatprep.subr.bf16.mxu0 0
      %496 = vmatpush2.bf16.msra.mxu0 0
      %497 = vmatprep.subr.bf16.mxu0 0
      %498 = vmatpush2.bf16.msra.mxu0 0
      %499 = vmatprep.mubr.bf16.mxu0 0
      %500 = vmatmul.mubr.bf16.gmra.mxu0 %v249
      %v501 = vpop.f32.mrf.mxu0
      %v502 = vadd.f32 %v422, %v501
      %v503 = vpop.f32.mrf.mxu0
      %v504 = vpop.f32.mrf.mxu0
      %v505 = vpop.f32.mrf.mxu0
      %506 = vdwg.mxu0
      %v507 = vadd.f32 %v248, %v461
      %v508 = vxor.u32 %v507, 2147483648
      %v509 = vmul.f32 %v508, 1.442695
      %v510 = vpow.pop %v509
      %v511 = vadd.f32 %v510, 1.0
      %v512 = vrcp.pop %v511
      %v513 = vmul.f32 1.0, %v512
      %v515 = vrot.slane %v248, 1
      %v517 = vadd.f32 %v515, %v463
      %v518 = vxor.u32 %v517, 2147483648
      %v519 = vmul.f32 %v518, 1.442695
      %v520 = vpow.pop %v519
      %v521 = vadd.f32 %v520, 1.0
      %v522 = vrcp.pop %v521
      %v523 = vmul.f32 1.0, %v522
      %v524 = vmul.f32 %v523, %v502
      %v525 = vrot.slane %v248, 2
      %v527 = vadd.f32 %v525, %v524
      %v528 = vsub.f32 1.0, %v513
      %v529 = vmul.f32 %v528, %v228
      %v530 = vmul.f32 %v513, %v527
      %v531 = vadd.f32 %v529, %v530
      %vm532 = vcmp.ge.f32.partialorder %v531, 0.0
      %v533 = vmul.f32 %v531, 0.01
      %v534 = vsel %vm532, %v531, %v533
      %v535 = vpack.c.bf16 %v534, %v534
      %v536 = vld [vmem:[%s7] sm:$0xff]
      %v537 = vld [vmem:[%s7 + $0x8] sm:$0xf]
      %v538 = vld [vmem:[%s7 + $0xc] sm:$0xff]
      %v539 = vld [vmem:[%s7 + $0x14] sm:$0xf]
      %v540 = vld [vmem:[%s7 + $0x18] sm:$0xff]
      %v541 = vld [vmem:[%s7 + $0x20] sm:$0xf]
      %v542 = vld [vmem:[%s7 + $0x24] sm:$0xff]
      %v543 = vld [vmem:[%s7 + $0x2c] sm:$0xf]
      %v544 = vld [vmem:[%s7 + $0x30] sm:$0xff]
      %v545 = vld [vmem:[%s7 + $0x38] sm:$0xf]
      %v546 = vld [vmem:[%s7 + $0x3c] sm:$0xff]
      %v547 = vld [vmem:[%s7 + $0x44] sm:$0xf]
      %v548 = vld [vmem:[%s7 + $0x48] sm:$0xff]
      %v549 = vld [vmem:[%s7 + $0x50] sm:$0xf]
      %v550 = vld [vmem:[%s7 + $0x54] sm:$0xff]
      %v551 = vld [vmem:[%s7 + $0x5c] sm:$0xf]
      %v552 = vld [vmem:[%s7 + $0x60] sm:$0xff]
      %v553 = vld [vmem:[%s7 + $0x68] sm:$0xf]
      %v554 = vld [vmem:[%s7 + $0x6c] sm:$0xff]
      %v555 = vld [vmem:[%s7 + $0x74] sm:$0xf]
      %v556 = vld [vmem:[%s7 + $0x78] sm:$0xff]
      %v557 = vld [vmem:[%s7 + $0x80] sm:$0xf]
      %v558 = vld [vmem:[%s7 + $0x84] sm:$0xff]
      %v559 = vld [vmem:[%s7 + $0x8c] sm:$0xf]
      %v560 = vld [vmem:[%s7 + $0x90] sm:$0xff]
      %v561 = vld [vmem:[%s7 + $0x98] sm:$0xf]
      %v562 = vld [vmem:[%s7 + $0x9c] sm:$0xff]
      %v563 = vld [vmem:[%s7 + $0xa4] sm:$0xf]
      %v564 = vld [vmem:[%s7 + $0xa8] sm:$0xff]
      %v565 = vld [vmem:[%s7 + $0xb0] sm:$0xf]
      %v566 = vld [vmem:[%s7 + $0xb4] sm:$0xff]
      %v567 = vld [vmem:[%s7 + $0xbc] sm:$0xf]
      %v600 = vunpack.c.l.b16 %v536
      %v601 = vunpack.c.h.b16 %v536
      %v602 = vunpack.c.l.b16 %v537
      %v603 = vunpack.c.l.b16 %v538
      %v604 = vunpack.c.h.b16 %v538
      %v605 = vunpack.c.l.b16 %v539
      %v606 = vunpack.c.l.b16 %v540
      %v607 = vunpack.c.h.b16 %v540
      %v608 = vunpack.c.l.b16 %v541
      %v609 = vunpack.c.l.b16 %v542
      %v610 = vunpack.c.h.b16 %v542
      %v611 = vunpack.c.l.b16 %v543
      %v612 = vunpack.c.l.b16 %v544
      %v613 = vunpack.c.h.b16 %v544
      %v614 = vunpack.c.l.b16 %v545
      %v615 = vunpack.c.l.b16 %v546
      %v616 = vunpack.c.h.b16 %v546
      %v617 = vunpack.c.l.b16 %v547
      %v618 = vunpack.c.l.b16 %v548
      %v619 = vunpack.c.h.b16 %v548
      %v620 = vunpack.c.l.b16 %v549
      %v621 = vunpack.c.l.b16 %v550
      %v622 = vunpack.c.h.b16 %v550
      %v623 = vunpack.c.l.b16 %v551
      %v624 = vunpack.c.l.b16 %v552
      %v625 = vunpack.c.h.b16 %v552
      %v626 = vunpack.c.l.b16 %v553
      %v627 = vunpack.c.l.b16 %v554
      %v628 = vunpack.c.h.b16 %v554
      %v629 = vunpack.c.l.b16 %v555
      %v630 = vunpack.c.l.b16 %v556
      %v631 = vunpack.c.h.b16 %v556
      %v632 = vunpack.c.l.b16 %v557
      %v633 = vunpack.c.l.b16 %v558
      %v634 = vunpack.c.h.b16 %v558
      %v635 = vunpack.c.l.b16 %v559
      %v636 = vunpack.c.l.b16 %v560
      %v637 = vunpack.c.h.b16 %v560
      %v638 = vunpack.c.l.b16 %v561
      %v639 = vunpack.c.l.b16 %v562
      %v640 = vunpack.c.h.b16 %v562
      %v641 = vunpack.c.l.b16 %v563
      %v642 = vunpack.c.l.b16 %v564
      %v643 = vunpack.c.h.b16 %v564
      %v644 = vunpack.c.l.b16 %v565
      %v645 = vunpack.c.l.b16 %v566
      %v646 = vunpack.c.h.b16 %v566
      %v647 = vunpack.c.l.b16 %v567
      %v648 = vpack.c.b16 %v603, %v600
      %v649 = vpack.c.b16 %v604, %v601
      %v650 = vpack.c.b16 %v605, %v602
      %v651 = vpack.c.b16 %v609, %v606
      %v652 = vpack.c.b16 %v610, %v607
      %v653 = vpack.c.b16 %v611, %v608
      %v654 = vpack.c.b16 %v615, %v612
      %v655 = vpack.c.b16 %v616, %v613
      %v656 = vpack.c.b16 %v617, %v614
      %v657 = vpack.c.b16 %v621, %v618
      %v658 = vpack.c.b16 %v622, %v619
      %v659 = vpack.c.b16 %v623, %v620
      %v660 = vpack.c.b16 %v627, %v624
      %v661 = vpack.c.b16 %v628, %v625
      %v662 = vpack.c.b16 %v629, %v626
      %v663 = vpack.c.b16 %v633, %v630
      %v664 = vpack.c.b16 %v634, %v631
      %v665 = vpack.c.b16 %v635, %v632
      %v666 = vpack.c.b16 %v639, %v636
      %v667 = vpack.c.b16 %v640, %v637
      %v668 = vpack.c.b16 %v641, %v638
      %v669 = vpack.c.b16 %v645, %v642
      %v670 = vpack.c.b16 %v646, %v643
      %v671 = vpack.c.b16 %v647, %v644
      %v697 = vlaneseq
      %v698 = vshrl.u32 %v697, 7
      %v699 = vsub.s32 0, %v698
      %v700 = vrot.slane %v200, %v699
      %v701 = vlaneseq
      %v702 = vshrl.u32 %v701, 7
      %v703 = vsub.s32 1, %v702
      %v704 = vrot.slane %v200, %v703
      %v705 = vlaneseq
      %v706 = vshrl.u32 %v705, 7
      %v707 = vsub.s32 2, %v706
      %v708 = vrot.slane %v200, %v707
      %712 = vmatprep.subr.bf16.mxu0 %v670
      %713 = vmatpush1.bf16.msra.mxu0 %v669
      %714 = vmatprep.subr.bf16.mxu0 %v667
      %715 = vmatpush1.bf16.msra.mxu0 %v666
      %716 = vmatprep.subr.bf16.mxu0 %v664
      %717 = vmatpush1.bf16.msra.mxu0 %v663
      %718 = vmatprep.subr.bf16.mxu0 %v661
      %719 = vmatpush1.bf16.msra.mxu0 %v660
      %720 = vmatprep.subr.bf16.mxu0 %v658
      %721 = vmatpush1.bf16.msra.mxu0 %v657
      %722 = vmatprep.subr.bf16.mxu0 %v655
      %723 = vmatpush1.bf16.msra.mxu0 %v654
      %724 = vmatprep.subr.bf16.mxu0 %v652
      %725 = vmatpush1.bf16.msra.mxu0 %v651
      %726 = vmatprep.subr.bf16.mxu0 %v649
      %727 = vmatpush1.bf16.msra.mxu0 %v648
      %728 = vmatprep.subr.bf16.mxu0 0
      %729 = vmatpush2.bf16.msra.mxu0 0
      %730 = vmatprep.subr.bf16.mxu0 0
      %731 = vmatpush2.bf16.msra.mxu0 0
      %732 = vmatprep.subr.bf16.mxu0 0
      %733 = vmatpush2.bf16.msra.mxu0 0
      %734 = vmatprep.subr.bf16.mxu0 0
      %735 = vmatpush2.bf16.msra.mxu0 0
      %736 = vmatprep.subr.bf16.mxu0 0
      %737 = vmatpush2.bf16.msra.mxu0 0
      %738 = vmatprep.subr.bf16.mxu0 0
      %739 = vmatpush2.bf16.msra.mxu0 0
      %740 = vmatprep.subr.bf16.mxu0 0
      %741 = vmatpush2.bf16.msra.mxu0 0
      %742 = vmatprep.subr.bf16.mxu0 0
      %743 = vmatpush2.bf16.msra.mxu0 0
      %744 = vmatprep.mubr.bf16.mxu0 0
      %745 = vmatmul.mubr.bf16.gmra.mxu0 %v535
      %v746 = vpop.f32.mrf.mxu0
      %v747 = vadd.f32 %v700, %v746
      %v748 = vpop.f32.mrf.mxu0
      %v749 = vadd.f32 %v704, %v748
      %v750 = vpop.f32.mrf.mxu0
      %v751 = vpop.f32.mrf.mxu0
      %752 = vdwg.mxu0
      %753 = vmatprep.subr.bf16.mxu0 0
      %754 = vmatpush1.bf16.msra.mxu0 %v671
      %755 = vmatprep.subr.bf16.mxu0 0
      %756 = vmatpush1.bf16.msra.mxu0 %v668
      %757 = vmatprep.subr.bf16.mxu0 0
      %758 = vmatpush1.bf16.msra.mxu0 %v665
      %759 = vmatprep.subr.bf16.mxu0 0
      %760 = vmatpush1.bf16.msra.mxu0 %v662
      %761 = vmatprep.subr.bf16.mxu0 0
      %762 = vmatpush1.bf16.msra.mxu0 %v659
      %763 = vmatprep.subr.bf16.mxu0 0
      %764 = vmatpush1.bf16.msra.mxu0 %v656
      %765 = vmatprep.subr.bf16.mxu0 0
      %766 = vmatpush1.bf16.msra.mxu0 %v653
      %767 = vmatprep.subr.bf16.mxu0 0
      %768 = vmatpush1.bf16.msra.mxu0 %v650
      %769 = vmatprep.subr.bf16.mxu0 0
      %770 = vmatpush2.bf16.msra.mxu0 0
      %771 = vmatprep.subr.bf16.mxu0 0
      %772 = vmatpush2.bf16.msra.mxu0 0
      %773 = vmatprep.subr.bf16.mxu0 0
      %774 = vmatpush2.bf16.msra.mxu0 0
      %775 = vmatprep.subr.bf16.mxu0 0
      %776 = vmatpush2.bf16.msra.mxu0 0
      %777 = vmatprep.subr.bf16.mxu0 0
      %778 = vmatpush2.bf16.msra.mxu0 0
      %779 = vmatprep.subr.bf16.mxu0 0
      %780 = vmatpush2.bf16.msra.mxu0 0
      %781 = vmatprep.subr.bf16.mxu0 0
      %782 = vmatpush2.bf16.msra.mxu0 0
      %783 = vmatprep.subr.bf16.mxu0 0
      %784 = vmatpush2.bf16.msra.mxu0 0
      %785 = vmatprep.mubr.bf16.mxu0 0
      %786 = vmatmul.mubr.bf16.gmra.mxu0 %v535
      %v787 = vpop.f32.mrf.mxu0
      %v788 = vadd.f32 %v708, %v787
      %v789 = vpop.f32.mrf.mxu0
      %v790 = vpop.f32.mrf.mxu0
      %v791 = vpop.f32.mrf.mxu0
      %792 = vdwg.mxu0
      %v793 = vpack.c.bf16 %v229, %v229
      %v794 = vld [vmem:[%s11] sm:$0xff]
      %v795 = vld [vmem:[%s11 + $0x8] sm:$0xf]
      %v796 = vld [vmem:[%s11 + $0xc] sm:$0xff]
      %v797 = vld [vmem:[%s11 + $0x14] sm:$0xf]
      %v798 = vld [vmem:[%s11 + $0x18] sm:$0xff]
      %v799 = vld [vmem:[%s11 + $0x20] sm:$0xf]
      %v800 = vld [vmem:[%s11 + $0x24] sm:$0xff]
      %v801 = vld [vmem:[%s11 + $0x2c] sm:$0xf]
      %v802 = vld [vmem:[%s11 + $0x30] sm:$0xff]
      %v803 = vld [vmem:[%s11 + $0x38] sm:$0xf]
      %v804 = vld [vmem:[%s11 + $0x3c] sm:$0xff]
      %v805 = vld [vmem:[%s11 + $0x44] sm:$0xf]
      %v806 = vld [vmem:[%s11 + $0x48] sm:$0xff]
      %v807 = vld [vmem:[%s11 + $0x50] sm:$0xf]
      %v808 = vld [vmem:[%s11 + $0x54] sm:$0xff]
      %v809 = vld [vmem:[%s11 + $0x5c] sm:$0xf]
      %v810 = vld [vmem:[%s11 + $0x60] sm:$0xff]
      %v811 = vld [vmem:[%s11 + $0x68] sm:$0xf]
      %v812 = vld [vmem:[%s11 + $0x6c] sm:$0xff]
      %v813 = vld [vmem:[%s11 + $0x74] sm:$0xf]
      %v814 = vld [vmem:[%s11 + $0x78] sm:$0xff]
      %v815 = vld [vmem:[%s11 + $0x80] sm:$0xf]
      %v816 = vld [vmem:[%s11 + $0x84] sm:$0xff]
      %v817 = vld [vmem:[%s11 + $0x8c] sm:$0xf]
      %v818 = vld [vmem:[%s11 + $0x90] sm:$0xff]
      %v819 = vld [vmem:[%s11 + $0x98] sm:$0xf]
      %v820 = vld [vmem:[%s11 + $0x9c] sm:$0xff]
      %v821 = vld [vmem:[%s11 + $0xa4] sm:$0xf]
      %v822 = vld [vmem:[%s11 + $0xa8] sm:$0xff]
      %v823 = vld [vmem:[%s11 + $0xb0] sm:$0xf]
      %v824 = vld [vmem:[%s11 + $0xb4] sm:$0xff]
      %v825 = vld [vmem:[%s11 + $0xbc] sm:$0xf]
      %v858 = vunpack.c.l.b16 %v794
      %v859 = vunpack.c.h.b16 %v794
      %v860 = vunpack.c.l.b16 %v795
      %v861 = vunpack.c.l.b16 %v796
      %v862 = vunpack.c.h.b16 %v796
      %v863 = vunpack.c.l.b16 %v797
      %v864 = vunpack.c.l.b16 %v798
      %v865 = vunpack.c.h.b16 %v798
      %v866 = vunpack.c.l.b16 %v799
      %v867 = vunpack.c.l.b16 %v800
      %v868 = vunpack.c.h.b16 %v800
      %v869 = vunpack.c.l.b16 %v801
      %v870 = vunpack.c.l.b16 %v802
      %v871 = vunpack.c.h.b16 %v802
      %v872 = vunpack.c.l.b16 %v803
      %v873 = vunpack.c.l.b16 %v804
      %v874 = vunpack.c.h.b16 %v804
      %v875 = vunpack.c.l.b16 %v805
      %v876 = vunpack.c.l.b16 %v806
      %v877 = vunpack.c.h.b16 %v806
      %v878 = vunpack.c.l.b16 %v807
      %v879 = vunpack.c.l.b16 %v808
      %v880 = vunpack.c.h.b16 %v808
      %v881 = vunpack.c.l.b16 %v809
      %v882 = vunpack.c.l.b16 %v810
      %v883 = vunpack.c.h.b16 %v810
      %v884 = vunpack.c.l.b16 %v811
      %v885 = vunpack.c.l.b16 %v812
      %v886 = vunpack.c.h.b16 %v812
      %v887 = vunpack.c.l.b16 %v813
      %v888 = vunpack.c.l.b16 %v814
      %v889 = vunpack.c.h.b16 %v814
      %v890 = vunpack.c.l.b16 %v815
      %v891 = vunpack.c.l.b16 %v816
      %v892 = vunpack.c.h.b16 %v816
      %v893 = vunpack.c.l.b16 %v817
      %v894 = vunpack.c.l.b16 %v818
      %v895 = vunpack.c.h.b16 %v818
      %v896 = vunpack.c.l.b16 %v819
      %v897 = vunpack.c.l.b16 %v820
      %v898 = vunpack.c.h.b16 %v820
      %v899 = vunpack.c.l.b16 %v821
      %v900 = vunpack.c.l.b16 %v822
      %v901 = vunpack.c.h.b16 %v822
      %v902 = vunpack.c.l.b16 %v823
      %v903 = vunpack.c.l.b16 %v824
      %v904 = vunpack.c.h.b16 %v824
      %v905 = vunpack.c.l.b16 %v825
      %v906 = vpack.c.b16 %v861, %v858
      %v907 = vpack.c.b16 %v862, %v859
      %v908 = vpack.c.b16 %v863, %v860
      %v909 = vpack.c.b16 %v867, %v864
      %v910 = vpack.c.b16 %v868, %v865
      %v911 = vpack.c.b16 %v869, %v866
      %v912 = vpack.c.b16 %v873, %v870
      %v913 = vpack.c.b16 %v874, %v871
      %v914 = vpack.c.b16 %v875, %v872
      %v915 = vpack.c.b16 %v879, %v876
      %v916 = vpack.c.b16 %v880, %v877
      %v917 = vpack.c.b16 %v881, %v878
      %v918 = vpack.c.b16 %v885, %v882
      %v919 = vpack.c.b16 %v886, %v883
      %v920 = vpack.c.b16 %v887, %v884
      %v921 = vpack.c.b16 %v891, %v888
      %v922 = vpack.c.b16 %v892, %v889
      %v923 = vpack.c.b16 %v893, %v890
      %v924 = vpack.c.b16 %v897, %v894
      %v925 = vpack.c.b16 %v898, %v895
      %v926 = vpack.c.b16 %v899, %v896
      %v927 = vpack.c.b16 %v903, %v900
      %v928 = vpack.c.b16 %v904, %v901
      %v929 = vpack.c.b16 %v905, %v902
      %v955 = vlaneseq
      %v956 = vshrl.u32 %v955, 7
      %v957 = vsub.s32 0, %v956
      %v958 = vrot.slane %v201, %v957
      %v959 = vlaneseq
      %v960 = vshrl.u32 %v959, 7
      %v961 = vsub.s32 1, %v960
      %v962 = vrot.slane %v201, %v961
      %v963 = vlaneseq
      %v964 = vshrl.u32 %v963, 7
      %v965 = vsub.s32 2, %v964
      %v966 = vrot.slane %v201, %v965
      %970 = vmatprep.subr.bf16.mxu0 %v928
      %971 = vmatpush1.bf16.msra.mxu0 %v927
      %972 = vmatprep.subr.bf16.mxu0 %v925
      %973 = vmatpush1.bf16.msra.mxu0 %v924
      %974 = vmatprep.subr.bf16.mxu0 %v922
      %975 = vmatpush1.bf16.msra.mxu0 %v921
      %976 = vmatprep.subr.bf16.mxu0 %v919
      %977 = vmatpush1.bf16.msra.mxu0 %v918
      %978 = vmatprep.subr.bf16.mxu0 %v916
      %979 = vmatpush1.bf16.msra.mxu0 %v915
      %980 = vmatprep.subr.bf16.mxu0 %v913
      %981 = vmatpush1.bf16.msra.mxu0 %v912
      %982 = vmatprep.subr.bf16.mxu0 %v910
      %983 = vmatpush1.bf16.msra.mxu0 %v909
      %984 = vmatprep.subr.bf16.mxu0 %v907
      %985 = vmatpush1.bf16.msra.mxu0 %v906
      %986 = vmatprep.subr.bf16.mxu0 0
      %987 = vmatpush2.bf16.msra.mxu0 0
      %988 = vmatprep.subr.bf16.mxu0 0
      %989 = vmatpush2.bf16.msra.mxu0 0
      %990 = vmatprep.subr.bf16.mxu0 0
      %991 = vmatpush2.bf16.msra.mxu0 0
      %992 = vmatprep.subr.bf16.mxu0 0
      %993 = vmatpush2.bf16.msra.mxu0 0
      %994 = vmatprep.subr.bf16.mxu0 0
      %995 = vmatpush2.bf16.msra.mxu0 0
      %996 = vmatprep.subr.bf16.mxu0 0
      %997 = vmatpush2.bf16.msra.mxu0 0
      %998 = vmatprep.subr.bf16.mxu0 0
      %999 = vmatpush2.bf16.msra.mxu0 0
      %1000 = vmatprep.subr.bf16.mxu0 0
      %1001 = vmatpush2.bf16.msra.mxu0 0
      %1002 = vmatprep.mubr.bf16.mxu0 0
      %1003 = vmatmul.mubr.bf16.gmra.mxu0 %v793
      %v1004 = vpop.f32.mrf.mxu0
      %v1005 = vadd.f32 %v958, %v1004
      %v1006 = vpop.f32.mrf.mxu0
      %v1007 = vadd.f32 %v962, %v1006
      %v1008 = vpop.f32.mrf.mxu0
      %v1009 = vpop.f32.mrf.mxu0
      %1010 = vdwg.mxu0
      %1011 = vmatprep.subr.bf16.mxu0 0
      %1012 = vmatpush1.bf16.msra.mxu0 %v929
      %1013 = vmatprep.subr.bf16.mxu0 0
      %1014 = vmatpush1.bf16.msra.mxu0 %v926
      %1015 = vmatprep.subr.bf16.mxu0 0
      %1016 = vmatpush1.bf16.msra.mxu0 %v923
      %1017 = vmatprep.subr.bf16.mxu0 0
      %1018 = vmatpush1.bf16.msra.mxu0 %v920
      %1019 = vmatprep.subr.bf16.mxu0 0
      %1020 = vmatpush1.bf16.msra.mxu0 %v917
      %1021 = vmatprep.subr.bf16.mxu0 0
      %1022 = vmatpush1.bf16.msra.mxu0 %v914
      %1023 = vmatprep.subr.bf16.mxu0 0
      %1024 = vmatpush1.bf16.msra.mxu0 %v911
      %1025 = vmatprep.subr.bf16.mxu0 0
      %1026 = vmatpush1.bf16.msra.mxu0 %v908
      %1027 = vmatprep.subr.bf16.mxu0 0
      %1028 = vmatpush2.bf16.msra.mxu0 0
      %1029 = vmatprep.subr.bf16.mxu0 0
      %1030 = vmatpush2.bf16.msra.mxu0 0
      %1031 = vmatprep.subr.bf16.mxu0 0
      %1032 = vmatpush2.bf16.msra.mxu0 0
      %1033 = vmatprep.subr.bf16.mxu0 0
      %1034 = vmatpush2.bf16.msra.mxu0 0
      %1035 = vmatprep.subr.bf16.mxu0 0
      %1036 = vmatpush2.bf16.msra.mxu0 0
      %1037 = vmatprep.subr.bf16.mxu0 0
      %1038 = vmatpush2.bf16.msra.mxu0 0
      %1039 = vmatprep.subr.bf16.mxu0 0
      %1040 = vmatpush2.bf16.msra.mxu0 0
      %1041 = vmatprep.subr.bf16.mxu0 0
      %1042 = vmatpush2.bf16.msra.mxu0 0
      %1043 = vmatprep.mubr.bf16.mxu0 0
      %1044 = vmatmul.mubr.bf16.gmra.mxu0 %v793
      %v1045 = vpop.f32.mrf.mxu0
      %v1046 = vadd.f32 %v966, %v1045
      %v1047 = vpop.f32.mrf.mxu0
      %v1048 = vpop.f32.mrf.mxu0
      %v1049 = vpop.f32.mrf.mxu0
      %1050 = vdwg.mxu0
      %v1051 = vadd.f32 %v747, %v1005
      %v1052 = vxor.u32 %v1051, 2147483648
      %v1053 = vmul.f32 %v1052, 1.442695
      %v1054 = vpow.pop %v1053
      %v1055 = vadd.f32 %v1054, 1.0
      %v1056 = vrcp.pop %v1055
      %v1057 = vmul.f32 1.0, %v1056
      %v1058 = vadd.f32 %v749, %v1007
      %v1059 = vxor.u32 %v1058, 2147483648
      %v1060 = vmul.f32 %v1059, 1.442695
      %v1061 = vpow.pop %v1060
      %v1062 = vadd.f32 %v1061, 1.0
      %v1063 = vrcp.pop %v1062
      %v1064 = vmul.f32 1.0, %v1063
      %v1065 = vmul.f32 %v1064, %v1046
      %v1066 = vadd.f32 %v788, %v1065
      %v1067 = vsub.f32 1.0, %v1057
      %v1068 = vmul.f32 %v1067, %v230
      %v1069 = vmul.f32 %v1057, %v1066
      %v1070 = vadd.f32 %v1068, %v1069
      %vm1071 = vcmp.ge.f32.partialorder %v1070, 0.0
      %v1072 = vmul.f32 %v1070, 0.01
      %v1073 = vsel %vm1071, %v1070, %v1072
      %v1074 = vlaneseq
      %v1075 = vshrl.u32 %v1074, 7
      %v1076 = vsub.s32 0, %v1075
      %v1077 = vrot.slane %v1073, %v1076
      %v1078 = vmul.f32 %v202, %v1077
      %v1079 = vmul.f32 %v203, %v1077
      %v1080 = vmul.f32 %v204, %v1077
      %v1081 = vmul.f32 %v205, %v1077
      %1082 = vadd.xlane.f32.xlu0 %v1078
      %v1083 = vpop.xlane.xlu0 %1082
      %1084 = vadd.xlane.f32.xlu0 %v1079
      %v1085 = vpop.xlane.xlu0 %1084
      %1086 = vadd.xlane.f32.xlu0 %v1080
      %v1087 = vpop.xlane.xlu0 %1086
      %1088 = vadd.xlane.f32.xlu0 %v1081
      %v1089 = vpop.xlane.xlu0 %1088
      %v1090 = vadd.f32 %v1083, %v206
      %v1091 = vadd.f32 %v1085, %v207
      %v1092 = vadd.f32 %v1087, %v208
      %v1093 = vadd.f32 %v1089, %v209
      %v1094 = vsub.f32 1.0, %v168
      %v1095 = vsub.f32 1.0, %v173
      %v1096 = vmul.f32 %v1094, %v231
      %v1097 = vmul.f32 %v1095, %v232
      %v1098 = vtanh.pop %v1092
      %v1099 = vtanh.pop %v1093
      %1101 = vset.pattern.permute.xlu0 0
      %1102 = vperm.xlu0 %1101, %v1098
      %v1103 = vpop.permute.xlu0 %1102
      %1106 = vset.pattern.permute.xlu0 0
      %1107 = vperm.xlu0 %1106, %v1099
      %v1108 = vpop.permute.xlu0 %1107
      %v1110 = vmul.f32 %v168, %v1103
      %v1111 = vmul.f32 %v173, %v1108
      %v1112 = vmul.f32 %v1110, %v236
      %v1113 = vmul.f32 %v1111, %v237
      %v1114 = vadd.f32 %v1096, %v1112
      %v1115 = vadd.f32 %v1097, %v1113
      %v1116 = vmul.f32 %v1114, %v1077
      %v1117 = vmul.f32 %v1115, %v1077
      %1118 = vadd.xlane.f32.xlu0 %v1116
      %v1119 = vpop.xlane.xlu0 %1118
      %1120 = vadd.xlane.f32.xlu0 %v1117
      %v1121 = vpop.xlane.xlu0 %1120
      %v1122 = vmul.f32 %v148, %v1119
      %v1123 = vmul.f32 %v150, %v1121
      %v1124 = vadd.f32 %v1090, %v1122
      %v1125 = vadd.f32 %v1091, %v1123
      %vm1126 = vcmask 7168
      %v1127 = vsel %vm1126, %v1124, -inf
      %v1128 = vsel %vm1126, %v1125, -inf
      %v1129 = vmax.f32 %v1127, %v1128
      %v1130 = vrot.slane %v1129, 4
      %v1131 = vmax.f32 %v1129, %v1130
      %v1132 = vrot.slane %v1131, 2
      %v1133 = vmax.f32 %v1131, %v1132
      %v1134 = vrot.slane %v1133, 1
      %v1135 = vmax.f32 %v1133, %v1134
      %v1136 = vsub.f32 %v1124, %v1135
      %v1137 = vsub.f32 %v1125, %v1135
      %v1138 = vmul.f32 %v1136, 1.442695
      %v1139 = vpow.pop %v1138
      %v1140 = vmul.f32 %v1137, 1.442695
      %v1141 = vpow.pop %v1140
      %v1142 = vsel %vm1126, %v1139, 0.0
      %v1143 = vsel %vm1126, %v1141, 0.0
      %v1144 = vadd.f32 %v1142, %v1143
      %v1145 = vrot.slane %v1144, 4
      %v1146 = vadd.f32 %v1144, %v1145
      %v1147 = vrot.slane %v1146, 2
      %v1148 = vadd.f32 %v1146, %v1147
      %v1149 = vrot.slane %v1148, 1
      %v1150 = vadd.f32 %v1148, %v1149
      %v1151 = vrcp.pop %v1150
      %v1152 = vmul.f32 %v1139, %v1151
      %v1153 = vmul.f32 %v1141, %v1151
      %s1154 = smul.u32 %s238, 16
      %s1155 = scalar_lea.vmem %s45, %s1154
      %1156 = vst.msk [vmem:[%s1155] sm:$0xff] %vm1126, %v1152
      %1157 = vst.msk [vmem:[%s1155 + $0x8] sm:$0xff] %vm1126, %v1153
      %v1158 = vsub.f32 1.0, %v122
      %v1159 = vmul.f32 %v1158, %v233
      %v1160 = vmul.f32 %v122, %v1073
      %v1161 = vadd.f32 %v1159, %v1160
      %v1162 = vsub.f32 1.0, %v134
      %v1163 = vsub.f32 1.0, %v136
      %v1164 = vmul.f32 %v1162, %v234
      %v1165 = vmul.f32 %v1163, %v235
      %v1166 = vmul.f32 %v134, %v1152
      %v1167 = vmul.f32 %v136, %v1153
      %v1168 = vadd.f32 %v1164, %v1166
      %v1169 = vadd.f32 %v1165, %v1167
      %1171 = vset.pattern.permute.xlu0 0
      %1172 = vperm.xlu0 %1171, %v1152
      %v1173 = vpop.permute.xlu0 %1172
      %1176 = vset.pattern.permute.xlu0 0
      %1177 = vperm.xlu0 %1176, %v1153
      %v1178 = vpop.permute.xlu0 %1177
      %v1181 = vlaneseq
      %v1182 = vshrl.u32 %v1181, 7
      %v1183 = vsub.s32 0, %v1182
      %v1184 = vrot.slane %v233, %v1183
      %v1186 = vmul.f32 %v1173, %v1184
      %v1187 = vmul.f32 %v1178, %v1184
      %1189 = vset.pattern.permute.xlu0 0
      %1190 = vperm.xlu0 %1189, %v234
      %v1191 = vpop.permute.xlu0 %1190
      %1194 = vset.pattern.permute.xlu0 0
      %1195 = vperm.xlu0 %1194, %v235
      %v1196 = vpop.permute.xlu0 %1195
      %v1198 = vmul.f32 %v1191, %v1077
      %v1199 = vmul.f32 %v1196, %v1077
      %v1200 = vsub.f32 %v1186, %v1198
      %v1201 = vsub.f32 %v1187, %v1199
      %v1202 = vsub.f32 1.0, %v192
      %v1203 = vsub.f32 1.0, %v197
      %v1204 = vmul.f32 %v1202, %v236
      %v1205 = vmul.f32 %v1203, %v237
      %v1206 = vmul.f32 %v192, %v1200
      %v1207 = vmul.f32 %v197, %v1201
      %v1208 = vadd.f32 %v1204, %v1206
      %v1209 = vadd.f32 %v1205, %v1207
      %s1210 = sshra.s32 %s239, 3
      %s1211 = sand.u32 %s239, 7
      %s1212 = sshra.s32 %s239, 3
      %s1213 = sand.u32 %s239, 7
      %s1214 = smul.u32 %s1210, 3
      %s1215 = smul.u32 %s1214, 8
      %s1216 = sadd.s32 %s1215, %s1213
      %s1217 = scalar_lea.vmem %s1, %s1216
      %v1218 = vld [vmem:[%s1217] ss:$8 sm:$0x7]
      %v1219 = vld [vmem:[%s3] sm:$0xff]
      %v1220 = vld [vmem:[%s3 + $0x8] sm:$0xf]
      %v1221 = vld [vmem:[%s3 + $0xc] sm:$0xff]
      %v1222 = vld [vmem:[%s3 + $0x14] sm:$0xf]
      %v1223 = vld [vmem:[%s3 + $0x18] sm:$0xff]
      %v1224 = vld [vmem:[%s3 + $0x20] sm:$0xf]
      %v1225 = vld [vmem:[%s3 + $0x24] sm:$0xff]
      %v1226 = vld [vmem:[%s3 + $0x2c] sm:$0xf]
      %v1227 = vld [vmem:[%s3 + $0x30] sm:$0xff]
      %v1228 = vld [vmem:[%s3 + $0x38] sm:$0xf]
      %v1229 = vld [vmem:[%s3 + $0x3c] sm:$0xff]
      %v1230 = vld [vmem:[%s3 + $0x44] sm:$0xf]
      %v1231 = vld [vmem:[%s3 + $0x48] sm:$0xff]
      %v1232 = vld [vmem:[%s3 + $0x50] sm:$0xf]
      %v1233 = vld [vmem:[%s3 + $0x54] sm:$0xff]
      %v1234 = vld [vmem:[%s3 + $0x5c] sm:$0xf]
      %v1235 = vld [vmem:[%s3 + $0x60] sm:$0xff]
      %v1236 = vld [vmem:[%s3 + $0x68] sm:$0xf]
      %v1237 = vld [vmem:[%s3 + $0x6c] sm:$0xff]
      %v1238 = vld [vmem:[%s3 + $0x74] sm:$0xf]
      %v1239 = vld [vmem:[%s3 + $0x78] sm:$0xff]
      %v1240 = vld [vmem:[%s3 + $0x80] sm:$0xf]
      %v1241 = vld [vmem:[%s3 + $0x84] sm:$0xff]
      %v1242 = vld [vmem:[%s3 + $0x8c] sm:$0xf]
      %v1243 = vld [vmem:[%s3 + $0x90] sm:$0xff]
      %v1244 = vld [vmem:[%s3 + $0x98] sm:$0xf]
      %v1245 = vld [vmem:[%s3 + $0x9c] sm:$0xff]
      %v1246 = vld [vmem:[%s3 + $0xa4] sm:$0xf]
      %v1247 = vld [vmem:[%s3 + $0xa8] sm:$0xff]
      %v1248 = vld [vmem:[%s3 + $0xb0] sm:$0xf]
      %v1249 = vld [vmem:[%s3 + $0xb4] sm:$0xff]
      %v1250 = vld [vmem:[%s3 + $0xbc] sm:$0xf]
      %v1283 = vunpack.c.l.b16 %v1219
      %v1284 = vunpack.c.h.b16 %v1219
      %v1285 = vunpack.c.l.b16 %v1220
      %v1286 = vunpack.c.l.b16 %v1221
      %v1287 = vunpack.c.h.b16 %v1221
      %v1288 = vunpack.c.l.b16 %v1222
      %v1289 = vunpack.c.l.b16 %v1223
      %v1290 = vunpack.c.h.b16 %v1223
      %v1291 = vunpack.c.l.b16 %v1224
      %v1292 = vunpack.c.l.b16 %v1225
      %v1293 = vunpack.c.h.b16 %v1225
      %v1294 = vunpack.c.l.b16 %v1226
      %v1295 = vunpack.c.l.b16 %v1227
      %v1296 = vunpack.c.h.b16 %v1227
      %v1297 = vunpack.c.l.b16 %v1228
      %v1298 = vunpack.c.l.b16 %v1229
      %v1299 = vunpack.c.h.b16 %v1229
      %v1300 = vunpack.c.l.b16 %v1230
      %v1301 = vunpack.c.l.b16 %v1231
      %v1302 = vunpack.c.h.b16 %v1231
      %v1303 = vunpack.c.l.b16 %v1232
      %v1304 = vunpack.c.l.b16 %v1233
      %v1305 = vunpack.c.h.b16 %v1233
      %v1306 = vunpack.c.l.b16 %v1234
      %v1307 = vunpack.c.l.b16 %v1235
      %v1308 = vunpack.c.h.b16 %v1235
      %v1309 = vunpack.c.l.b16 %v1236
      %v1310 = vunpack.c.l.b16 %v1237
      %v1311 = vunpack.c.h.b16 %v1237
      %v1312 = vunpack.c.l.b16 %v1238
      %v1313 = vunpack.c.l.b16 %v1239
      %v1314 = vunpack.c.h.b16 %v1239
      %v1315 = vunpack.c.l.b16 %v1240
      %v1316 = vunpack.c.l.b16 %v1241
      %v1317 = vunpack.c.h.b16 %v1241
      %v1318 = vunpack.c.l.b16 %v1242
      %v1319 = vunpack.c.l.b16 %v1243
      %v1320 = vunpack.c.h.b16 %v1243
      %v1321 = vunpack.c.l.b16 %v1244
      %v1322 = vunpack.c.l.b16 %v1245
      %v1323 = vunpack.c.h.b16 %v1245
      %v1324 = vunpack.c.l.b16 %v1246
      %v1325 = vunpack.c.l.b16 %v1247
      %v1326 = vunpack.c.h.b16 %v1247
      %v1327 = vunpack.c.l.b16 %v1248
      %v1328 = vunpack.c.l.b16 %v1249
      %v1329 = vunpack.c.h.b16 %v1249
      %v1330 = vunpack.c.l.b16 %v1250
      %v1331 = vpack.c.b16 %v1286, %v1283
      %v1332 = vpack.c.b16 %v1287, %v1284
      %v1333 = vpack.c.b16 %v1288, %v1285
      %v1334 = vpack.c.b16 %v1292, %v1289
      %v1335 = vpack.c.b16 %v1293, %v1290
      %v1336 = vpack.c.b16 %v1294, %v1291
      %v1337 = vpack.c.b16 %v1298, %v1295
      %v1338 = vpack.c.b16 %v1299, %v1296
      %v1339 = vpack.c.b16 %v1300, %v1297
      %v1340 = vpack.c.b16 %v1304, %v1301
      %v1341 = vpack.c.b16 %v1305, %v1302
      %v1342 = vpack.c.b16 %v1306, %v1303
      %v1343 = vpack.c.b16 %v1310, %v1307
      %v1344 = vpack.c.b16 %v1311, %v1308
      %v1345 = vpack.c.b16 %v1312, %v1309
      %v1346 = vpack.c.b16 %v1316, %v1313
      %v1347 = vpack.c.b16 %v1317, %v1314
      %v1348 = vpack.c.b16 %v1318, %v1315
      %v1349 = vpack.c.b16 %v1322, %v1319
      %v1350 = vpack.c.b16 %v1323, %v1320
      %v1351 = vpack.c.b16 %v1324, %v1321
      %v1352 = vpack.c.b16 %v1328, %v1325
      %v1353 = vpack.c.b16 %v1329, %v1326
      %v1354 = vpack.c.b16 %v1330, %v1327
      %1379 = vmatprep.subr.bf16.mxu0 %v1353
      %1380 = vmatpush1.bf16.msra.mxu0 %v1352
      %1381 = vmatprep.subr.bf16.mxu0 %v1350
      %1382 = vmatpush1.bf16.msra.mxu0 %v1349
      %1383 = vmatprep.subr.bf16.mxu0 %v1347
      %1384 = vmatpush1.bf16.msra.mxu0 %v1346
      %1385 = vmatprep.subr.bf16.mxu0 %v1344
      %1386 = vmatpush1.bf16.msra.mxu0 %v1343
      %1387 = vmatprep.subr.bf16.mxu0 %v1341
      %1388 = vmatpush1.bf16.msra.mxu0 %v1340
      %1389 = vmatprep.subr.bf16.mxu0 %v1338
      %1390 = vmatpush1.bf16.msra.mxu0 %v1337
      %1391 = vmatprep.subr.bf16.mxu0 %v1335
      %1392 = vmatpush1.bf16.msra.mxu0 %v1334
      %1393 = vmatprep.subr.bf16.mxu0 %v1332
      %1394 = vmatpush1.bf16.msra.mxu0 %v1331
      %1395 = vmatprep.subr.bf16.mxu0 0
      %1396 = vmatpush2.bf16.msra.mxu0 0
      %1397 = vmatprep.subr.bf16.mxu0 0
      %1398 = vmatpush2.bf16.msra.mxu0 0
      %1399 = vmatprep.subr.bf16.mxu0 0
      %1400 = vmatpush2.bf16.msra.mxu0 0
      %1401 = vmatprep.subr.bf16.mxu0 0
      %1402 = vmatpush2.bf16.msra.mxu0 0
      %1403 = vmatprep.subr.bf16.mxu0 0
      %1404 = vmatpush2.bf16.msra.mxu0 0
      %1405 = vmatprep.subr.bf16.mxu0 0
      %1406 = vmatpush2.bf16.msra.mxu0 0
      %1407 = vmatprep.subr.bf16.mxu0 0
      %1408 = vmatpush2.bf16.msra.mxu0 0
      %1409 = vmatprep.subr.bf16.mxu0 0
      %1410 = vmatpush2.bf16.msra.mxu0 0
      %1411 = vmatprep.mubr.bf16.mxu0 0
      %1412 = vmatmul.mubr.bf16.gmra.mxu0 %v535
      %v1413 = vpop.f32.mrf.mxu0
      %v1414 = vadd.f32 %v414, %v1413
      %v1415 = vpop.f32.mrf.mxu0
      %v1416 = vadd.f32 %v418, %v1415
      %v1417 = vpop.f32.mrf.mxu0
      %v1418 = vpop.f32.mrf.mxu0
      %1419 = vdwg.mxu0
      %1420 = vmatprep.subr.bf16.mxu0 0
      %1421 = vmatpush1.bf16.msra.mxu0 %v1354
      %1422 = vmatprep.subr.bf16.mxu0 0
      %1423 = vmatpush1.bf16.msra.mxu0 %v1351
      %1424 = vmatprep.subr.bf16.mxu0 0
      %1425 = vmatpush1.bf16.msra.mxu0 %v1348
      %1426 = vmatprep.subr.bf16.mxu0 0
      %1427 = vmatpush1.bf16.msra.mxu0 %v1345
      %1428 = vmatprep.subr.bf16.mxu0 0
      %1429 = vmatpush1.bf16.msra.mxu0 %v1342
      %1430 = vmatprep.subr.bf16.mxu0 0
      %1431 = vmatpush1.bf16.msra.mxu0 %v1339
      %1432 = vmatprep.subr.bf16.mxu0 0
      %1433 = vmatpush1.bf16.msra.mxu0 %v1336
      %1434 = vmatprep.subr.bf16.mxu0 0
      %1435 = vmatpush1.bf16.msra.mxu0 %v1333
      %1436 = vmatprep.subr.bf16.mxu0 0
      %1437 = vmatpush2.bf16.msra.mxu0 0
      %1438 = vmatprep.subr.bf16.mxu0 0
      %1439 = vmatpush2.bf16.msra.mxu0 0
      %1440 = vmatprep.subr.bf16.mxu0 0
      %1441 = vmatpush2.bf16.msra.mxu0 0
      %1442 = vmatprep.subr.bf16.mxu0 0
      %1443 = vmatpush2.bf16.msra.mxu0 0
      %1444 = vmatprep.subr.bf16.mxu0 0
      %1445 = vmatpush2.bf16.msra.mxu0 0
      %1446 = vmatprep.subr.bf16.mxu0 0
      %1447 = vmatpush2.bf16.msra.mxu0 0
      %1448 = vmatprep.subr.bf16.mxu0 0
      %1449 = vmatpush2.bf16.msra.mxu0 0
      %1450 = vmatprep.subr.bf16.mxu0 0
      %1451 = vmatpush2.bf16.msra.mxu0 0
      %1452 = vmatprep.mubr.bf16.mxu0 0
      %1453 = vmatmul.mubr.bf16.gmra.mxu0 %v535
      %v1454 = vpop.f32.mrf.mxu0
      %v1455 = vadd.f32 %v422, %v1454
      %v1456 = vpop.f32.mrf.mxu0
      %v1457 = vpop.f32.mrf.mxu0
      %v1458 = vpop.f32.mrf.mxu0
      %1459 = vdwg.mxu0
      %v1460 = vadd.f32 %v1218, %v1414
      %v1461 = vxor.u32 %v1460, 2147483648
      %v1462 = vmul.f32 %v1461, 1.442695
      %v1463 = vpow.pop %v1462
      %v1464 = vadd.f32 %v1463, 1.0
      %v1465 = vrcp.pop %v1464
      %v1466 = vmul.f32 1.0, %v1465
      %v1468 = vrot.slane %v1218, 1
      %v1470 = vadd.f32 %v1468, %v1416
      %v1471 = vxor.u32 %v1470, 2147483648
      %v1472 = vmul.f32 %v1471, 1.442695
      %v1473 = vpow.pop %v1472
      %v1474 = vadd.f32 %v1473, 1.0
      %v1475 = vrcp.pop %v1474
      %v1476 = vmul.f32 1.0, %v1475
      %v1477 = vmul.f32 %v1476, %v1455
      %v1478 = vrot.slane %v1218, 2
      %v1480 = vadd.f32 %v1478, %v1477
      %v1481 = vsub.f32 1.0, %v1466
      %v1482 = vmul.f32 %v1481, %v531
      %v1483 = vmul.f32 %v1466, %v1480
      %v1484 = vadd.f32 %v1482, %v1483
      %vm1485 = vcmp.ge.f32.partialorder %v1484, 0.0
      %v1486 = vmul.f32 %v1484, 0.01
      %v1487 = vsel %vm1485, %v1484, %v1486
      %v1488 = vpack.c.bf16 %v1487, %v1487
      %v1489 = vld [vmem:[%s7] sm:$0xff]
      %v1490 = vld [vmem:[%s7 + $0x8] sm:$0xf]
      %v1491 = vld [vmem:[%s7 + $0xc] sm:$0xff]
      %v1492 = vld [vmem:[%s7 + $0x14] sm:$0xf]
      %v1493 = vld [vmem:[%s7 + $0x18] sm:$0xff]
      %v1494 = vld [vmem:[%s7 + $0x20] sm:$0xf]
      %v1495 = vld [vmem:[%s7 + $0x24] sm:$0xff]
      %v1496 = vld [vmem:[%s7 + $0x2c] sm:$0xf]
      %v1497 = vld [vmem:[%s7 + $0x30] sm:$0xff]
      %v1498 = vld [vmem:[%s7 + $0x38] sm:$0xf]
      %v1499 = vld [vmem:[%s7 + $0x3c] sm:$0xff]
      %v1500 = vld [vmem:[%s7 + $0x44] sm:$0xf]
      %v1501 = vld [vmem:[%s7 + $0x48] sm:$0xff]
      %v1502 = vld [vmem:[%s7 + $0x50] sm:$0xf]
      %v1503 = vld [vmem:[%s7 + $0x54] sm:$0xff]
      %v1504 = vld [vmem:[%s7 + $0x5c] sm:$0xf]
      %v1505 = vld [vmem:[%s7 + $0x60] sm:$0xff]
      %v1506 = vld [vmem:[%s7 + $0x68] sm:$0xf]
      %v1507 = vld [vmem:[%s7 + $0x6c] sm:$0xff]
      %v1508 = vld [vmem:[%s7 + $0x74] sm:$0xf]
      %v1509 = vld [vmem:[%s7 + $0x78] sm:$0xff]
      %v1510 = vld [vmem:[%s7 + $0x80] sm:$0xf]
      %v1511 = vld [vmem:[%s7 + $0x84] sm:$0xff]
      %v1512 = vld [vmem:[%s7 + $0x8c] sm:$0xf]
      %v1513 = vld [vmem:[%s7 + $0x90] sm:$0xff]
      %v1514 = vld [vmem:[%s7 + $0x98] sm:$0xf]
      %v1515 = vld [vmem:[%s7 + $0x9c] sm:$0xff]
      %v1516 = vld [vmem:[%s7 + $0xa4] sm:$0xf]
      %v1517 = vld [vmem:[%s7 + $0xa8] sm:$0xff]
      %v1518 = vld [vmem:[%s7 + $0xb0] sm:$0xf]
      %v1519 = vld [vmem:[%s7 + $0xb4] sm:$0xff]
      %v1520 = vld [vmem:[%s7 + $0xbc] sm:$0xf]
      %v1553 = vunpack.c.l.b16 %v1489
      %v1554 = vunpack.c.h.b16 %v1489
      %v1555 = vunpack.c.l.b16 %v1490
      %v1556 = vunpack.c.l.b16 %v1491
      %v1557 = vunpack.c.h.b16 %v1491
      %v1558 = vunpack.c.l.b16 %v1492
      %v1559 = vunpack.c.l.b16 %v1493
      %v1560 = vunpack.c.h.b16 %v1493
      %v1561 = vunpack.c.l.b16 %v1494
      %v1562 = vunpack.c.l.b16 %v1495
      %v1563 = vunpack.c.h.b16 %v1495
      %v1564 = vunpack.c.l.b16 %v1496
      %v1565 = vunpack.c.l.b16 %v1497
      %v1566 = vunpack.c.h.b16 %v1497
      %v1567 = vunpack.c.l.b16 %v1498
      %v1568 = vunpack.c.l.b16 %v1499
      %v1569 = vunpack.c.h.b16 %v1499
      %v1570 = vunpack.c.l.b16 %v1500
      %v1571 = vunpack.c.l.b16 %v1501
      %v1572 = vunpack.c.h.b16 %v1501
      %v1573 = vunpack.c.l.b16 %v1502
      %v1574 = vunpack.c.l.b16 %v1503
      %v1575 = vunpack.c.h.b16 %v1503
      %v1576 = vunpack.c.l.b16 %v1504
      %v1577 = vunpack.c.l.b16 %v1505
      %v1578 = vunpack.c.h.b16 %v1505
      %v1579 = vunpack.c.l.b16 %v1506
      %v1580 = vunpack.c.l.b16 %v1507
      %v1581 = vunpack.c.h.b16 %v1507
      %v1582 = vunpack.c.l.b16 %v1508
      %v1583 = vunpack.c.l.b16 %v1509
      %v1584 = vunpack.c.h.b16 %v1509
      %v1585 = vunpack.c.l.b16 %v1510
      %v1586 = vunpack.c.l.b16 %v1511
      %v1587 = vunpack.c.h.b16 %v1511
      %v1588 = vunpack.c.l.b16 %v1512
      %v1589 = vunpack.c.l.b16 %v1513
      %v1590 = vunpack.c.h.b16 %v1513
      %v1591 = vunpack.c.l.b16 %v1514
      %v1592 = vunpack.c.l.b16 %v1515
      %v1593 = vunpack.c.h.b16 %v1515
      %v1594 = vunpack.c.l.b16 %v1516
      %v1595 = vunpack.c.l.b16 %v1517
      %v1596 = vunpack.c.h.b16 %v1517
      %v1597 = vunpack.c.l.b16 %v1518
      %v1598 = vunpack.c.l.b16 %v1519
      %v1599 = vunpack.c.h.b16 %v1519
      %v1600 = vunpack.c.l.b16 %v1520
      %v1601 = vpack.c.b16 %v1556, %v1553
      %v1602 = vpack.c.b16 %v1557, %v1554
      %v1603 = vpack.c.b16 %v1558, %v1555
      %v1604 = vpack.c.b16 %v1562, %v1559
      %v1605 = vpack.c.b16 %v1563, %v1560
      %v1606 = vpack.c.b16 %v1564, %v1561
      %v1607 = vpack.c.b16 %v1568, %v1565
      %v1608 = vpack.c.b16 %v1569, %v1566
      %v1609 = vpack.c.b16 %v1570, %v1567
      %v1610 = vpack.c.b16 %v1574, %v1571
      %v1611 = vpack.c.b16 %v1575, %v1572
      %v1612 = vpack.c.b16 %v1576, %v1573
      %v1613 = vpack.c.b16 %v1580, %v1577
      %v1614 = vpack.c.b16 %v1581, %v1578
      %v1615 = vpack.c.b16 %v1582, %v1579
      %v1616 = vpack.c.b16 %v1586, %v1583
      %v1617 = vpack.c.b16 %v1587, %v1584
      %v1618 = vpack.c.b16 %v1588, %v1585
      %v1619 = vpack.c.b16 %v1592, %v1589
      %v1620 = vpack.c.b16 %v1593, %v1590
      %v1621 = vpack.c.b16 %v1594, %v1591
      %v1622 = vpack.c.b16 %v1598, %v1595
      %v1623 = vpack.c.b16 %v1599, %v1596
      %v1624 = vpack.c.b16 %v1600, %v1597
      %1649 = vmatprep.subr.bf16.mxu0 %v1623
      %1650 = vmatpush1.bf16.msra.mxu0 %v1622
      %1651 = vmatprep.subr.bf16.mxu0 %v1620
      %1652 = vmatpush1.bf16.msra.mxu0 %v1619
      %1653 = vmatprep.subr.bf16.mxu0 %v1617
      %1654 = vmatpush1.bf16.msra.mxu0 %v1616
      %1655 = vmatprep.subr.bf16.mxu0 %v1614
      %1656 = vmatpush1.bf16.msra.mxu0 %v1613
      %1657 = vmatprep.subr.bf16.mxu0 %v1611
      %1658 = vmatpush1.bf16.msra.mxu0 %v1610
      %1659 = vmatprep.subr.bf16.mxu0 %v1608
      %1660 = vmatpush1.bf16.msra.mxu0 %v1607
      %1661 = vmatprep.subr.bf16.mxu0 %v1605
      %1662 = vmatpush1.bf16.msra.mxu0 %v1604
      %1663 = vmatprep.subr.bf16.mxu0 %v1602
      %1664 = vmatpush1.bf16.msra.mxu0 %v1601
      %1665 = vmatprep.subr.bf16.mxu0 0
      %1666 = vmatpush2.bf16.msra.mxu0 0
      %1667 = vmatprep.subr.bf16.mxu0 0
      %1668 = vmatpush2.bf16.msra.mxu0 0
      %1669 = vmatprep.subr.bf16.mxu0 0
      %1670 = vmatpush2.bf16.msra.mxu0 0
      %1671 = vmatprep.subr.bf16.mxu0 0
      %1672 = vmatpush2.bf16.msra.mxu0 0
      %1673 = vmatprep.subr.bf16.mxu0 0
      %1674 = vmatpush2.bf16.msra.mxu0 0
      %1675 = vmatprep.subr.bf16.mxu0 0
      %1676 = vmatpush2.bf16.msra.mxu0 0
      %1677 = vmatprep.subr.bf16.mxu0 0
      %1678 = vmatpush2.bf16.msra.mxu0 0
      %1679 = vmatprep.subr.bf16.mxu0 0
      %1680 = vmatpush2.bf16.msra.mxu0 0
      %1681 = vmatprep.mubr.bf16.mxu0 0
      %1682 = vmatmul.mubr.bf16.gmra.mxu0 %v1488
      %v1683 = vpop.f32.mrf.mxu0
      %v1684 = vadd.f32 %v700, %v1683
      %v1685 = vpop.f32.mrf.mxu0
      %v1686 = vadd.f32 %v704, %v1685
      %v1687 = vpop.f32.mrf.mxu0
      %v1688 = vpop.f32.mrf.mxu0
      %1689 = vdwg.mxu0
      %1690 = vmatprep.subr.bf16.mxu0 0
      %1691 = vmatpush1.bf16.msra.mxu0 %v1624
      %1692 = vmatprep.subr.bf16.mxu0 0
      %1693 = vmatpush1.bf16.msra.mxu0 %v1621
      %1694 = vmatprep.subr.bf16.mxu0 0
      %1695 = vmatpush1.bf16.msra.mxu0 %v1618
      %1696 = vmatprep.subr.bf16.mxu0 0
      %1697 = vmatpush1.bf16.msra.mxu0 %v1615
      %1698 = vmatprep.subr.bf16.mxu0 0
      %1699 = vmatpush1.bf16.msra.mxu0 %v1612
      %1700 = vmatprep.subr.bf16.mxu0 0
      %1701 = vmatpush1.bf16.msra.mxu0 %v1609
      %1702 = vmatprep.subr.bf16.mxu0 0
      %1703 = vmatpush1.bf16.msra.mxu0 %v1606
      %1704 = vmatprep.subr.bf16.mxu0 0
      %1705 = vmatpush1.bf16.msra.mxu0 %v1603
      %1706 = vmatprep.subr.bf16.mxu0 0
      %1707 = vmatpush2.bf16.msra.mxu0 0
      %1708 = vmatprep.subr.bf16.mxu0 0
      %1709 = vmatpush2.bf16.msra.mxu0 0
      %1710 = vmatprep.subr.bf16.mxu0 0
      %1711 = vmatpush2.bf16.msra.mxu0 0
      %1712 = vmatprep.subr.bf16.mxu0 0
      %1713 = vmatpush2.bf16.msra.mxu0 0
      %1714 = vmatprep.subr.bf16.mxu0 0
      %1715 = vmatpush2.bf16.msra.mxu0 0
      %1716 = vmatprep.subr.bf16.mxu0 0
      %1717 = vmatpush2.bf16.msra.mxu0 0
      %1718 = vmatprep.subr.bf16.mxu0 0
      %1719 = vmatpush2.bf16.msra.mxu0 0
      %1720 = vmatprep.subr.bf16.mxu0 0
      %1721 = vmatpush2.bf16.msra.mxu0 0
      %1722 = vmatprep.mubr.bf16.mxu0 0
      %1723 = vmatmul.mubr.bf16.gmra.mxu0 %v1488
      %v1724 = vpop.f32.mrf.mxu0
      %v1725 = vadd.f32 %v708, %v1724
      %v1726 = vpop.f32.mrf.mxu0
      %v1727 = vpop.f32.mrf.mxu0
      %v1728 = vpop.f32.mrf.mxu0
      %1729 = vdwg.mxu0
      %v1730 = vpack.c.bf16 %v1073, %v1073
      %v1731 = vld [vmem:[%s11] sm:$0xff]
      %v1732 = vld [vmem:[%s11 + $0x8] sm:$0xf]
      %v1733 = vld [vmem:[%s11 + $0xc] sm:$0xff]
      %v1734 = vld [vmem:[%s11 + $0x14] sm:$0xf]
      %v1735 = vld [vmem:[%s11 + $0x18] sm:$0xff]
      %v1736 = vld [vmem:[%s11 + $0x20] sm:$0xf]
      %v1737 = vld [vmem:[%s11 + $0x24] sm:$0xff]
      %v1738 = vld [vmem:[%s11 + $0x2c] sm:$0xf]
      %v1739 = vld [vmem:[%s11 + $0x30] sm:$0xff]
      %v1740 = vld [vmem:[%s11 + $0x38] sm:$0xf]
      %v1741 = vld [vmem:[%s11 + $0x3c] sm:$0xff]
      %v1742 = vld [vmem:[%s11 + $0x44] sm:$0xf]
      %v1743 = vld [vmem:[%s11 + $0x48] sm:$0xff]
      %v1744 = vld [vmem:[%s11 + $0x50] sm:$0xf]
      %v1745 = vld [vmem:[%s11 + $0x54] sm:$0xff]
      %v1746 = vld [vmem:[%s11 + $0x5c] sm:$0xf]
      %v1747 = vld [vmem:[%s11 + $0x60] sm:$0xff]
      %v1748 = vld [vmem:[%s11 + $0x68] sm:$0xf]
      %v1749 = vld [vmem:[%s11 + $0x6c] sm:$0xff]
      %v1750 = vld [vmem:[%s11 + $0x74] sm:$0xf]
      %v1751 = vld [vmem:[%s11 + $0x78] sm:$0xff]
      %v1752 = vld [vmem:[%s11 + $0x80] sm:$0xf]
      %v1753 = vld [vmem:[%s11 + $0x84] sm:$0xff]
      %v1754 = vld [vmem:[%s11 + $0x8c] sm:$0xf]
      %v1755 = vld [vmem:[%s11 + $0x90] sm:$0xff]
      %v1756 = vld [vmem:[%s11 + $0x98] sm:$0xf]
      %v1757 = vld [vmem:[%s11 + $0x9c] sm:$0xff]
      %v1758 = vld [vmem:[%s11 + $0xa4] sm:$0xf]
      %v1759 = vld [vmem:[%s11 + $0xa8] sm:$0xff]
      %v1760 = vld [vmem:[%s11 + $0xb0] sm:$0xf]
      %v1761 = vld [vmem:[%s11 + $0xb4] sm:$0xff]
      %v1762 = vld [vmem:[%s11 + $0xbc] sm:$0xf]
      %v1795 = vunpack.c.l.b16 %v1731
      %v1796 = vunpack.c.h.b16 %v1731
      %v1797 = vunpack.c.l.b16 %v1732
      %v1798 = vunpack.c.l.b16 %v1733
      %v1799 = vunpack.c.h.b16 %v1733
      %v1800 = vunpack.c.l.b16 %v1734
      %v1801 = vunpack.c.l.b16 %v1735
      %v1802 = vunpack.c.h.b16 %v1735
      %v1803 = vunpack.c.l.b16 %v1736
      %v1804 = vunpack.c.l.b16 %v1737
      %v1805 = vunpack.c.h.b16 %v1737
      %v1806 = vunpack.c.l.b16 %v1738
      %v1807 = vunpack.c.l.b16 %v1739
      %v1808 = vunpack.c.h.b16 %v1739
      %v1809 = vunpack.c.l.b16 %v1740
      %v1810 = vunpack.c.l.b16 %v1741
      %v1811 = vunpack.c.h.b16 %v1741
      %v1812 = vunpack.c.l.b16 %v1742
      %v1813 = vunpack.c.l.b16 %v1743
      %v1814 = vunpack.c.h.b16 %v1743
      %v1815 = vunpack.c.l.b16 %v1744
      %v1816 = vunpack.c.l.b16 %v1745
      %v1817 = vunpack.c.h.b16 %v1745
      %v1818 = vunpack.c.l.b16 %v1746
      %v1819 = vunpack.c.l.b16 %v1747
      %v1820 = vunpack.c.h.b16 %v1747
      %v1821 = vunpack.c.l.b16 %v1748
      %v1822 = vunpack.c.l.b16 %v1749
      %v1823 = vunpack.c.h.b16 %v1749
      %v1824 = vunpack.c.l.b16 %v1750
      %v1825 = vunpack.c.l.b16 %v1751
      %v1826 = vunpack.c.h.b16 %v1751
      %v1827 = vunpack.c.l.b16 %v1752
      %v1828 = vunpack.c.l.b16 %v1753
      %v1829 = vunpack.c.h.b16 %v1753
      %v1830 = vunpack.c.l.b16 %v1754
      %v1831 = vunpack.c.l.b16 %v1755
      %v1832 = vunpack.c.h.b16 %v1755
      %v1833 = vunpack.c.l.b16 %v1756
      %v1834 = vunpack.c.l.b16 %v1757
      %v1835 = vunpack.c.h.b16 %v1757
      %v1836 = vunpack.c.l.b16 %v1758
      %v1837 = vunpack.c.l.b16 %v1759
      %v1838 = vunpack.c.h.b16 %v1759
      %v1839 = vunpack.c.l.b16 %v1760
      %v1840 = vunpack.c.l.b16 %v1761
      %v1841 = vunpack.c.h.b16 %v1761
      %v1842 = vunpack.c.l.b16 %v1762
      %v1843 = vpack.c.b16 %v1798, %v1795
      %v1844 = vpack.c.b16 %v1799, %v1796
      %v1845 = vpack.c.b16 %v1800, %v1797
      %v1846 = vpack.c.b16 %v1804, %v1801
      %v1847 = vpack.c.b16 %v1805, %v1802
      %v1848 = vpack.c.b16 %v1806, %v1803
      %v1849 = vpack.c.b16 %v1810, %v1807
      %v1850 = vpack.c.b16 %v1811, %v1808
      %v1851 = vpack.c.b16 %v1812, %v1809
      %v1852 = vpack.c.b16 %v1816, %v1813
      %v1853 = vpack.c.b16 %v1817, %v1814
      %v1854 = vpack.c.b16 %v1818, %v1815
      %v1855 = vpack.c.b16 %v1822, %v1819
      %v1856 = vpack.c.b16 %v1823, %v1820
      %v1857 = vpack.c.b16 %v1824, %v1821
      %v1858 = vpack.c.b16 %v1828, %v1825
      %v1859 = vpack.c.b16 %v1829, %v1826
      %v1860 = vpack.c.b16 %v1830, %v1827
      %v1861 = vpack.c.b16 %v1834, %v1831
      %v1862 = vpack.c.b16 %v1835, %v1832
      %v1863 = vpack.c.b16 %v1836, %v1833
      %v1864 = vpack.c.b16 %v1840, %v1837
      %v1865 = vpack.c.b16 %v1841, %v1838
      %v1866 = vpack.c.b16 %v1842, %v1839
      %1891 = vmatprep.subr.bf16.mxu0 %v1865
      %1892 = vmatpush1.bf16.msra.mxu0 %v1864
      %1893 = vmatprep.subr.bf16.mxu0 %v1862
      %1894 = vmatpush1.bf16.msra.mxu0 %v1861
      %1895 = vmatprep.subr.bf16.mxu0 %v1859
      %1896 = vmatpush1.bf16.msra.mxu0 %v1858
      %1897 = vmatprep.subr.bf16.mxu0 %v1856
      %1898 = vmatpush1.bf16.msra.mxu0 %v1855
      %1899 = vmatprep.subr.bf16.mxu0 %v1853
      %1900 = vmatpush1.bf16.msra.mxu0 %v1852
      %1901 = vmatprep.subr.bf16.mxu0 %v1850
      %1902 = vmatpush1.bf16.msra.mxu0 %v1849
      %1903 = vmatprep.subr.bf16.mxu0 %v1847
      %1904 = vmatpush1.bf16.msra.mxu0 %v1846
      %1905 = vmatprep.subr.bf16.mxu0 %v1844
      %1906 = vmatpush1.bf16.msra.mxu0 %v1843
      %1907 = vmatprep.subr.bf16.mxu0 0
      %1908 = vmatpush2.bf16.msra.mxu0 0
      %1909 = vmatprep.subr.bf16.mxu0 0
      %1910 = vmatpush2.bf16.msra.mxu0 0
      %1911 = vmatprep.subr.bf16.mxu0 0
      %1912 = vmatpush2.bf16.msra.mxu0 0
      %1913 = vmatprep.subr.bf16.mxu0 0
      %1914 = vmatpush2.bf16.msra.mxu0 0
      %1915 = vmatprep.subr.bf16.mxu0 0
      %1916 = vmatpush2.bf16.msra.mxu0 0
      %1917 = vmatprep.subr.bf16.mxu0 0
      %1918 = vmatpush2.bf16.msra.mxu0 0
      %1919 = vmatprep.subr.bf16.mxu0 0
      %1920 = vmatpush2.bf16.msra.mxu0 0
      %1921 = vmatprep.subr.bf16.mxu0 0
      %1922 = vmatpush2.bf16.msra.mxu0 0
      %1923 = vmatprep.mubr.bf16.mxu0 0
      %1924 = vmatmul.mubr.bf16.gmra.mxu0 %v1730
      %v1925 = vpop.f32.mrf.mxu0
      %v1926 = vadd.f32 %v958, %v1925
      %v1927 = vpop.f32.mrf.mxu0
      %v1928 = vadd.f32 %v962, %v1927
      %v1929 = vpop.f32.mrf.mxu0
      %v1930 = vpop.f32.mrf.mxu0
      %1931 = vdwg.mxu0
      %1932 = vmatprep.subr.bf16.mxu0 0
      %1933 = vmatpush1.bf16.msra.mxu0 %v1866
      %1934 = vmatprep.subr.bf16.mxu0 0
      %1935 = vmatpush1.bf16.msra.mxu0 %v1863
      %1936 = vmatprep.subr.bf16.mxu0 0
      %1937 = vmatpush1.bf16.msra.mxu0 %v1860
      %1938 = vmatprep.subr.bf16.mxu0 0
      %1939 = vmatpush1.bf16.msra.mxu0 %v1857
      %1940 = vmatprep.subr.bf16.mxu0 0
      %1941 = vmatpush1.bf16.msra.mxu0 %v1854
      %1942 = vmatprep.subr.bf16.mxu0 0
      %1943 = vmatpush1.bf16.msra.mxu0 %v1851
      %1944 = vmatprep.subr.bf16.mxu0 0
      %1945 = vmatpush1.bf16.msra.mxu0 %v1848
      %1946 = vmatprep.subr.bf16.mxu0 0
      %1947 = vmatpush1.bf16.msra.mxu0 %v1845
      %1948 = vmatprep.subr.bf16.mxu0 0
      %1949 = vmatpush2.bf16.msra.mxu0 0
      %1950 = vmatprep.subr.bf16.mxu0 0
      %1951 = vmatpush2.bf16.msra.mxu0 0
      %1952 = vmatprep.subr.bf16.mxu0 0
      %1953 = vmatpush2.bf16.msra.mxu0 0
      %1954 = vmatprep.subr.bf16.mxu0 0
      %1955 = vmatpush2.bf16.msra.mxu0 0
      %1956 = vmatprep.subr.bf16.mxu0 0
      %1957 = vmatpush2.bf16.msra.mxu0 0
      %1958 = vmatprep.subr.bf16.mxu0 0
      %1959 = vmatpush2.bf16.msra.mxu0 0
      %1960 = vmatprep.subr.bf16.mxu0 0
      %1961 = vmatpush2.bf16.msra.mxu0 0
      %1962 = vmatprep.subr.bf16.mxu0 0
      %1963 = vmatpush2.bf16.msra.mxu0 0
      %1964 = vmatprep.mubr.bf16.mxu0 0
      %1965 = vmatmul.mubr.bf16.gmra.mxu0 %v1730
      %v1966 = vpop.f32.mrf.mxu0
      %v1967 = vadd.f32 %v966, %v1966
      %v1968 = vpop.f32.mrf.mxu0
      %v1969 = vpop.f32.mrf.mxu0
      %v1970 = vpop.f32.mrf.mxu0
      %1971 = vdwg.mxu0
      %v1972 = vadd.f32 %v1684, %v1926
      %v1973 = vxor.u32 %v1972, 2147483648
      %v1974 = vmul.f32 %v1973, 1.442695
      %v1975 = vpow.pop %v1974
      %v1976 = vadd.f32 %v1975, 1.0
      %v1977 = vrcp.pop %v1976
      %v1978 = vmul.f32 1.0, %v1977
      %v1979 = vadd.f32 %v1686, %v1928
      %v1980 = vxor.u32 %v1979, 2147483648
      %v1981 = vmul.f32 %v1980, 1.442695
      %v1982 = vpow.pop %v1981
      %v1983 = vadd.f32 %v1982, 1.0
      %v1984 = vrcp.pop %v1983
      %v1985 = vmul.f32 1.0, %v1984
      %v1986 = vmul.f32 %v1985, %v1967
      %v1987 = vadd.f32 %v1725, %v1986
      %v1988 = vsub.f32 1.0, %v1978
      %v1989 = vmul.f32 %v1988, %v1070
      %v1990 = vmul.f32 %v1978, %v1987
      %v1991 = vadd.f32 %v1989, %v1990
      %vm1992 = vcmp.ge.f32.partialorder %v1991, 0.0
      %v1993 = vmul.f32 %v1991, 0.01
      %v1994 = vsel %vm1992, %v1991, %v1993
      %v1995 = vlaneseq
      %v1996 = vshrl.u32 %v1995, 7
      %v1997 = vsub.s32 0, %v1996
      %v1998 = vrot.slane %v1994, %v1997
      %v1999 = vmul.f32 %v202, %v1998
      %v2000 = vmul.f32 %v203, %v1998
      %v2001 = vmul.f32 %v204, %v1998
      %v2002 = vmul.f32 %v205, %v1998
      %2003 = vadd.xlane.f32.xlu0 %v1999
      %v2004 = vpop.xlane.xlu0 %2003
      %2005 = vadd.xlane.f32.xlu0 %v2000
      %v2006 = vpop.xlane.xlu0 %2005
      %2007 = vadd.xlane.f32.xlu0 %v2001
      %v2008 = vpop.xlane.xlu0 %2007
      %2009 = vadd.xlane.f32.xlu0 %v2002
      %v2010 = vpop.xlane.xlu0 %2009
      %v2011 = vadd.f32 %v2004, %v206
      %v2012 = vadd.f32 %v2006, %v207
      %v2013 = vadd.f32 %v2008, %v208
      %v2014 = vadd.f32 %v2010, %v209
      %v2015 = vmul.f32 %v1094, %v1114
      %v2016 = vmul.f32 %v1095, %v1115
      %v2017 = vtanh.pop %v2013
      %v2018 = vtanh.pop %v2014
      %2020 = vset.pattern.permute.xlu0 0
      %2021 = vperm.xlu0 %2020, %v2017
      %v2022 = vpop.permute.xlu0 %2021
      %2025 = vset.pattern.permute.xlu0 0
      %2026 = vperm.xlu0 %2025, %v2018
      %v2027 = vpop.permute.xlu0 %2026
      %v2029 = vmul.f32 %v168, %v2022
      %v2030 = vmul.f32 %v173, %v2027
      %v2031 = vmul.f32 %v2029, %v1208
      %v2032 = vmul.f32 %v2030, %v1209
      %v2033 = vadd.f32 %v2015, %v2031
      %v2034 = vadd.f32 %v2016, %v2032
      %v2035 = vmul.f32 %v2033, %v1998
      %v2036 = vmul.f32 %v2034, %v1998
      %2037 = vadd.xlane.f32.xlu0 %v2035
      %v2038 = vpop.xlane.xlu0 %2037
      %2039 = vadd.xlane.f32.xlu0 %v2036
      %v2040 = vpop.xlane.xlu0 %2039
      %v2041 = vmul.f32 %v148, %v2038
      %v2042 = vmul.f32 %v150, %v2040
      %v2043 = vadd.f32 %v2011, %v2041
      %v2044 = vadd.f32 %v2012, %v2042
      %v2045 = vsel %vm1126, %v2043, -inf
      %v2046 = vsel %vm1126, %v2044, -inf
      %v2047 = vmax.f32 %v2045, %v2046
      %v2048 = vrot.slane %v2047, 4
      %v2049 = vmax.f32 %v2047, %v2048
      %v2050 = vrot.slane %v2049, 2
      %v2051 = vmax.f32 %v2049, %v2050
      %v2052 = vrot.slane %v2051, 1
      %v2053 = vmax.f32 %v2051, %v2052
      %v2054 = vsub.f32 %v2043, %v2053
      %v2055 = vsub.f32 %v2044, %v2053
      %v2056 = vmul.f32 %v2054, 1.442695
      %v2057 = vpow.pop %v2056
      %v2058 = vmul.f32 %v2055, 1.442695
      %v2059 = vpow.pop %v2058
      %v2060 = vsel %vm1126, %v2057, 0.0
      %v2061 = vsel %vm1126, %v2059, 0.0
      %v2062 = vadd.f32 %v2060, %v2061
      %v2063 = vrot.slane %v2062, 4
      %v2064 = vadd.f32 %v2062, %v2063
      %v2065 = vrot.slane %v2064, 2
      %v2066 = vadd.f32 %v2064, %v2065
      %v2067 = vrot.slane %v2066, 1
      %v2068 = vadd.f32 %v2066, %v2067
      %v2069 = vrcp.pop %v2068
      %v2070 = vmul.f32 %v2057, %v2069
      %v2071 = vmul.f32 %v2059, %v2069
      %s2072 = smul.u32 %s239, 16
      %s2073 = scalar_lea.vmem %s45, %s2072
      %2074 = vst.msk [vmem:[%s2073] sm:$0xff] %vm1126, %v2070
      %2075 = vst.msk [vmem:[%s2073 + $0x8] sm:$0xff] %vm1126, %v2071
      %v2076 = vmul.f32 %v1158, %v1161
      %v2077 = vmul.f32 %v122, %v1994
      %v2078 = vadd.f32 %v2076, %v2077
      %v2079 = vmul.f32 %v1162, %v1168
      %v2080 = vmul.f32 %v1163, %v1169
      %v2081 = vmul.f32 %v134, %v2070
      %v2082 = vmul.f32 %v136, %v2071
      %v2083 = vadd.f32 %v2079, %v2081
      %v2084 = vadd.f32 %v2080, %v2082
      %2086 = vset.pattern.permute.xlu0 0
      %2087 = vperm.xlu0 %2086, %v2070
      %v2088 = vpop.permute.xlu0 %2087
      %2091 = vset.pattern.permute.xlu0 0
      %2092 = vperm.xlu0 %2091, %v2071
      %v2093 = vpop.permute.xlu0 %2092
      %v2096 = vlaneseq
      %v2097 = vshrl.u32 %v2096, 7
      %v2098 = vsub.s32 0, %v2097
      %v2099 = vrot.slane %v1161, %v2098
      %v2101 = vmul.f32 %v2088, %v2099
      %v2102 = vmul.f32 %v2093, %v2099
      %2104 = vset.pattern.permute.xlu0 0
      %2105 = vperm.xlu0 %2104, %v1168
      %v2106 = vpop.permute.xlu0 %2105
      %2109 = vset.pattern.permute.xlu0 0
      %2110 = vperm.xlu0 %2109, %v1169
      %v2111 = vpop.permute.xlu0 %2110
      %v2113 = vmul.f32 %v2106, %v1998
      %v2114 = vmul.f32 %v2111, %v1998
      %v2115 = vsub.f32 %v2101, %v2113
      %v2116 = vsub.f32 %v2102, %v2114
      %v2117 = vmul.f32 %v1202, %v1208
      %v2118 = vmul.f32 %v1203, %v1209
      %v2119 = vmul.f32 %v192, %v2115
      %v2120 = vmul.f32 %v197, %v2116
      %v2121 = vadd.f32 %v2117, %v2119
      %v2122 = vadd.f32 %v2118, %v2120
    $region94: #{fn.1} parent=1 // loop_footer
      %s226 = sadd.s32 1, %s222
    $region95: #{fn.1} parent=1 // loop_footer_branch
      %221 = sbr.rel target = $region91
    $region96: #{fn.1} parent=1 // loop_exit
      _
    %2123 = vst [vmem:[#allocation2] sm:$0x1] %v228
    %2124 = vst [vmem:[#allocation4] sm:$0x1] %v227
    %2125 = vst [vmem:[#allocation6] sm:$0x1] %v230
    %2126 = vst [vmem:[#allocation7] sm:$0x1] %v229
    %2127 = vst [vmem:[#allocation9] sm:$0xff] %v231
    %2128 = vst [vmem:[#allocation9 + $0x8] sm:$0xff] %v232
    %2129 = vst [vmem:[#allocation10] sm:$0x1] %v233
    %vm2130 = vcmask 7168
    %2131 = vst.msk [vmem:[%s59] sm:$0xff] %vm2130, %v234
    %2132 = vst.msk [vmem:[%s59 + $0x8] sm:$0xff] %vm2130, %v235
    %2133 = vst [vmem:[#allocation12] sm:$0xff] %v236
    %2134 = vst [vmem:[#allocation12 + $0x8] sm:$0xff] %v237
    // Predicated region
    $region97: #{fn.1} parent=1 // pred_check
      _
    $region98: #{fn.1} parent=1 // pred_check_branch
      %2136 = sbr.rel (0) target = $region100
    $region99: #{fn.1} parent=1 // pred_region
      _
    $region100: #{fn.1} parent=1 // pred_fallthru
      _
    // Predicated region
    $region101: #{fn.1} parent=1 // pred_check
      _
    $region102: #{fn.1} parent=1 // pred_check_branch
      %2138 = sbr.rel (0) target = $region104
    $region103: #{fn.1} parent=1 // pred_region
      %s2140 = ssub.s32 16, 16
      %2141 = vsyncadd [#allocation3], %s2140
      %s2143 = sshll.u32 [#allocation2], 4
      %s2144 = int_to_ptr.vmem [resolvable:$true] %s2143
      %2146 = dma.vmem_to_hbm [thread:$0]  %s2144, 16, %s47, [#allocation3]
    $region104: #{fn.1} parent=1 // pred_fallthru
      _
    // Predicated region
    $region105: #{fn.1} parent=1 // pred_check
      _
    $region106: #{fn.1} parent=1 // pred_check_branch
      %2148 = sbr.rel (0) target = $region108
    $region107: #{fn.1} parent=1 // pred_region
      %s2150 = ssub.s32 16, 16
      %2151 = vsyncadd [#allocation5], %s2150
      %s2153 = sshll.u32 [#allocation4], 4
      %s2154 = int_to_ptr.vmem [resolvable:$true] %s2153
      %2156 = dma.vmem_to_hbm [thread:$0]  %s2154, 16, %s49, [#allocation5]
    $region108: #{fn.1} parent=1 // pred_fallthru
      _
    // Predicated region
    $region109: #{fn.1} parent=1 // pred_check
      _
    $region110: #{fn.1} parent=1 // pred_check_branch
      %2158 = sbr.rel (0) target = $region112
    $region111: #{fn.1} parent=1 // pred_region
      %s2160 = ssub.s32 16, 16
      %2161 = vsyncadd [#allocation5], %s2160
      %s2163 = sshll.u32 [#allocation6], 4
      %s2164 = int_to_ptr.vmem [resolvable:$true] %s2163
      %2166 = dma.vmem_to_hbm [thread:$0]  %s2164, 16, %s51, [#allocation5]
    $region112: #{fn.1} parent=1 // pred_fallthru
      _
    // Predicated region
    $region113: #{fn.1} parent=1 // pred_check
      _
    $region114: #{fn.1} parent=1 // pred_check_branch
      %2168 = sbr.rel (0) target = $region116
    $region115: #{fn.1} parent=1 // pred_region
      %s2170 = ssub.s32 16, 16
      %2171 = vsyncadd [#allocation8], %s2170
      %s2173 = sshll.u32 [#allocation7], 4
      %s2174 = int_to_ptr.vmem [resolvable:$true] %s2173
      %2176 = dma.vmem_to_hbm [thread:$0]  %s2174, 16, %s53, [#allocation8]
    $region116: #{fn.1} parent=1 // pred_fallthru
      _
    // Predicated region
    $region117: #{fn.1} parent=1 // pred_check
      _
    $region118: #{fn.1} parent=1 // pred_check_branch
      %2178 = sbr.rel (0) target = $region120
    $region119: #{fn.1} parent=1 // pred_region
      %s2180 = ssub.s32 256, 256
      %2181 = vsyncadd [#allocation8], %s2180
      %s2182 = sshll.u32 [#allocation9], 4
      %s2183 = int_to_ptr.vmem [resolvable:$true] %s2182
      %2188 = dma.vmem_to_hbm [thread:$0]  %s2183, 256, %s55, [#allocation8], 128, 128, 8
    $region120: #{fn.1} parent=1 // pred_fallthru
      _
    // Predicated region
    $region121: #{fn.1} parent=1 // pred_check
      _
    $region122: #{fn.1} parent=1 // pred_check_branch
      %2190 = sbr.rel (0) target = $region124
    $region123: #{fn.1} parent=1 // pred_region
      %s2192 = ssub.s32 16, 16
      %2193 = vsyncadd [#allocation11], %s2192
      %s2195 = sshll.u32 [#allocation10], 4
      %s2196 = int_to_ptr.vmem [resolvable:$true] %s2195
      %2198 = dma.vmem_to_hbm [thread:$0]  %s2196, 16, %s57, [#allocation11]
    $region124: #{fn.1} parent=1 // pred_fallthru
      _
    // Predicated region
    $region125: #{fn.1} parent=1 // pred_check
      _
    $region126: #{fn.1} parent=1 // pred_check_branch
      %2200 = sbr.rel (0) target = $region128
    $region127: #{fn.1} parent=1 // pred_region
      _
    $region128: #{fn.1} parent=1 // pred_fallthru
      _
    // Predicated region
    $region129: #{fn.1} parent=1 // pred_check
      _
    $region130: #{fn.1} parent=1 // pred_check_branch
      %2202 = sbr.rel (0) target = $region132
    $region131: #{fn.1} parent=1 // pred_region
      %s2204 = ssub.s32 256, 256
      %2205 = vsyncadd [#allocation11], %s2204
      %s2206 = sshll.u32 [#allocation12], 4
      %s2207 = int_to_ptr.vmem [resolvable:$true] %s2206
      %2212 = dma.vmem_to_hbm [thread:$0]  %s2207, 256, %s61, [#allocation11], 128, 128, 8
    $region132: #{fn.1} parent=1 // pred_fallthru
      _
    // Predicated region
    $region133: #{fn.1} parent=1 // pred_check
      _
    $region134: #{fn.1} parent=1 // pred_check_branch
      %2214 = sbr.rel (0) target = $region136
    $region135: #{fn.1} parent=1 // pred_region
      _
    $region136: #{fn.1} parent=1 // pred_fallthru
      _
    // Predicated region
    $region137: #{fn.1} parent=1 // pred_check
      _
    $region138: #{fn.1} parent=1 // pred_check_branch
      %2216 = sbr.rel (0) target = $region140
    $region139: #{fn.1} parent=1 // pred_region
      %2217 = dma.done [#allocation3], 16
    $region140: #{fn.1} parent=1 // pred_fallthru
      _
    // Predicated region
    $region141: #{fn.1} parent=1 // pred_check
      _
    $region142: #{fn.1} parent=1 // pred_check_branch
      %2219 = sbr.rel (0) target = $region144
    $region143: #{fn.1} parent=1 // pred_region
      %2220 = dma.done [#allocation5], 16
    $region144: #{fn.1} parent=1 // pred_fallthru
      _
    // Predicated region
    $region145: #{fn.1} parent=1 // pred_check
      _
    $region146: #{fn.1} parent=1 // pred_check_branch
      %2222 = sbr.rel (0) target = $region148
    $region147: #{fn.1} parent=1 // pred_region
      %2223 = dma.done [#allocation5], 16
    $region148: #{fn.1} parent=1 // pred_fallthru
      _
    // Predicated region
    $region149: #{fn.1} parent=1 // pred_check
      _
    $region150: #{fn.1} parent=1 // pred_check_branch
      %2225 = sbr.rel (0) target = $region152
    $region151: #{fn.1} parent=1 // pred_region
      %2226 = dma.done [#allocation8], 16
    $region152: #{fn.1} parent=1 // pred_fallthru
      _
    // Predicated region
    $region153: #{fn.1} parent=1 // pred_check
      _
    $region154: #{fn.1} parent=1 // pred_check_branch
      %2228 = sbr.rel (0) target = $region156
    $region155: #{fn.1} parent=1 // pred_region
      %2229 = dma.done [#allocation8], 256
    $region156: #{fn.1} parent=1 // pred_fallthru
      _
    // Predicated region
    $region157: #{fn.1} parent=1 // pred_check
      _
    $region158: #{fn.1} parent=1 // pred_check_branch
      %2231 = sbr.rel (0) target = $region160
    $region159: #{fn.1} parent=1 // pred_region
      %2232 = dma.done [#allocation11], 16
    $region160: #{fn.1} parent=1 // pred_fallthru
      _
    // Predicated region
    $region161: #{fn.1} parent=1 // pred_check
      _
    $region162: #{fn.1} parent=1 // pred_check_branch
      %2234 = sbr.rel (0) target = $region164
    $region163: #{fn.1} parent=1 // pred_region
      _
    $region164: #{fn.1} parent=1 // pred_fallthru
      _
    // Predicated region
    $region165: #{fn.1} parent=1 // pred_check
      _
    $region166: #{fn.1} parent=1 // pred_check_branch
      %2236 = sbr.rel (0) target = $region168
    $region167: #{fn.1} parent=1 // pred_region
      %2237 = dma.done [#allocation11], 256
    $region168: #{fn.1} parent=1 // pred_fallthru
      _
    %2238 = vsyncpa [#allocation3], 1
    %2239 = vsyncpa [#allocation5], 1
    %2240 = vsyncpa [#allocation8], 1
    %2241 = vsyncpa [#allocation11], 1

</llo_original>
